<compile_context>
chip_gen: v5e
topology: v5e:2x2
jax: 0.10.0
libtpu: 0.0.40
codegen_flags: <defaults>
</compile_context>

<pallas_src>
import functools

import jax
import jax.numpy as jnp
from jax.experimental import pallas as pl
from jax.experimental.pallas import tpu as pltpu


def _round_up(x: int, m: int) -> int:
    return ((x + m - 1) // m) * m


def _vmem_capacity_bytes() -> int:
    """Physical per-TensorCore VMEM: 128 MiB (v5e/v6e), 64 MiB (v7x)."""
    try:
        cap = int(pltpu.get_tpu_info().vmem_capacity_bytes)
        if cap > 0:
            return cap
    except Exception:
        pass
    return 64 * 1024 * 1024  # conservative default: assume v7x


def _additive_attention_kernel(x_ref, w_ref, b_ref, q_ref, o_ref, *, s_valid: int):
    # x_ref: (TB, S_pad, D) block of batch rows
    # w_ref: (D, Q)   linear weight, pre-transposed (VMEM-resident)
    # b_ref: (1, Q)   linear bias row
    # q_ref: (1, Q)   attention query row
    # o_ref: (TB, D)  output block
    TB, S, D = x_ref.shape
    Q = w_ref.shape[1]

    # hidden = tanh(x @ W^T + b) as ONE tall-skinny (TB*S, D) @ (D, Q) MXU
    # matmul with f32 accumulation. S is padded to a multiple of 8 by the
    # wrapper, so this reshape is a pure layout reinterpretation (no copy).
    x2 = x_ref[...].reshape(TB * S, D)
    h = jnp.dot(x2, w_ref[...], preferred_element_type=jnp.float32) + b_ref[...]
    a = jnp.tanh(h).reshape(TB, S, Q)                     # (TB, S, Q)

    # scores = a . query  -> VPU broadcast-multiply + lane reduce (MXU stays free)
    scores = jnp.sum(a * q_ref[...], axis=-1)             # (TB, S), f32

    # Mask padded sequence positions (if any) before the softmax.
    if s_valid < S:
        pos = jax.lax.broadcasted_iota(jnp.int32, (TB, S), 1)
        scores = jnp.where(pos < s_valid, scores, -jnp.inf)

    # Numerically-stable softmax over the sequence axis. Exact division:
    # the approximate EUP reciprocal bought no wall time (kernel is DMA-bound)
    # and cost accuracy.
    m = jnp.max(scores, axis=-1, keepdims=True)
    e = jnp.exp(scores - m)
    wts = e / jnp.sum(e, axis=-1, keepdims=True)          # (TB, S), f32

    # Weighted sum over S without materializing a (TB, S, D) f32 temporary:
    # unrolled accumulation keeps the live temporary at (TB, D). Padded
    # positions (s >= s_valid) are skipped entirely (their weight is 0 anyway).
    acc = wts[:, 0:1] * x_ref[:, 0, :].astype(jnp.float32)
    for s in range(1, s_valid):
        acc = acc + wts[:, s:s + 1] * x_ref[:, s, :].astype(jnp.float32)

    # TODO(synk): for D < 128 a lane-dense packed (TB//k, k*D) output store
    # would avoid masked partial stores, but requires a sublane->lane relayout;
    # output traffic is only ~1/S of the streamed bytes here, so left out.
    o_ref[...] = acc.astype(o_ref.dtype)


def additive_attention(x, weight, bias, query, *, block_b=None):
    """
    x:      (B, S, D)
    weight: (Q, D)   (PyTorch nn.Linear layout)
    bias:   (Q,)
    query:  (Q,)
    returns (B, D)
    """
    B, S, D = x.shape
    Q = query.shape[0]
    itemsize = x.dtype.itemsize

    # ---- pad S to a multiple of 8 (padded positions masked in-kernel) ------
    s_pad = _round_up(max(S, 1), 8)
    if s_pad != S:
        x = jnp.pad(x, ((0, 0), (0, s_pad - S), (0, 0)))

    # ---- VMEM accounting: bytes held live per batch row per grid step ------
    lane = 128
    x_row = s_pad * D * itemsize                           # x block (x2: double-buffered)
    hidden_row = s_pad * _round_up(Q, lane) * 4            # f32 tanh activation, lane-padded
    scores_row = 2 * _round_up(s_pad, lane) * 4            # scores + exp rows, lane-padded
    out_row = _round_up(D, lane) * 4 + 2 * D * itemsize    # f32 accumulator + 2x out block
    per_row = 2 * x_row + hidden_row + scores_row + out_row

    # ---- per-generation budget ---------------------------------------------
    # scoped limit = 3/4 of physical VMEM (96 MiB v5e/v6e, 48 MiB v7x);
    # use ~70% of it for the batch blocks (headroom for weights / compiler scratch).
    vmem_limit = (_vmem_capacity_bytes() * 3) // 4
    budget = (vmem_limit * 7) // 10
    max_tb = max(8, (budget // per_row) // 8 * 8)

    # ---- choose TB: VMEM-budget driven; block_b only as an explicit cap ----
    b_ceil = _round_up(B, 8)
    min_steps = pl.cdiv(b_ceil, max_tb)
    if B > 8:
        min_steps = max(min_steps, 2)      # keep >=2 grid steps for v7x's 2 TCs
    tb = min(max_tb, _round_up(pl.cdiv(b_ceil, min_steps), 8))
    if block_b is not None:
        tb = min(tb, max(8, (int(block_b) // 8) * 8))
    b_pad = _round_up(B, tb)

    # zero-pad batch (padded rows give uniform softmax over zeros -> 0 output,
    # finite everywhere, and are sliced off below)
    if b_pad != B:
        x = jnp.pad(x, ((0, b_pad - B), (0, 0), (0, 0)))

    w_t = jnp.asarray(weight).T              # (D, Q)
    b2 = jnp.asarray(bias).reshape(1, Q)     # (1, Q)
    q2 = jnp.asarray(query).reshape(1, Q)    # (1, Q)

    kernel = functools.partial(_additive_attention_kernel, s_valid=S)

    out = pl.pallas_call(
        kernel,
        out_shape=jax.ShapeDtypeStruct((b_pad, D), x.dtype),
        grid_spec=pltpu.PrefetchScalarGridSpec(
            num_scalar_prefetch=0,
            grid=(b_pad // tb,),
            in_specs=[
                pl.BlockSpec((tb, s_pad, D), lambda i: (i, 0, 0)),
                pl.BlockSpec((D, Q), lambda i: (0, 0)),   # resident weight
                pl.BlockSpec((1, Q), lambda i: (0, 0)),   # resident bias
                pl.BlockSpec((1, Q), lambda i: (0, 0)),   # resident query
            ],
            out_specs=pl.BlockSpec((tb, D), lambda i: (i, 0)),
        ),
        compiler_params=pltpu.CompilerParams(
            dimension_semantics=("parallel",),   # batch axis is embarrassingly parallel
            vmem_limit_bytes=int(vmem_limit),
        ),
    )(x, w_t, b2, q2)
    return out[:B]


def additive_attention_ref(x, weight, bias, query):
    a = jnp.tanh(jnp.einsum("bsd,qd->bsq", x, weight) + bias)
    scores = jnp.einsum("bsq,q->bs", a, query)
    w = jax.nn.softmax(scores, axis=1)
    return jnp.einsum("bs,bsd->bd", w, x)


if __name__ == "__main__":
    key = jax.random.PRNGKey(0)
    kx, kw, kb, kq, kx2 = jax.random.split(key, 5)

    # small shapes consistent with the module: (batch, seq, input_dim), query_dim
    B, S, D, Q = 16, 8, 32, 16
    x = jax.random.normal(kx, (B, S, D), dtype=jnp.float32)
    weight = jax.random.uniform(kw, (Q, D), minval=-0.1, maxval=0.1, dtype=jnp.float32)
    bias = jax.random.uniform(kb, (Q,), minval=-0.1, maxval=0.1, dtype=jnp.float32)
    query = jax.random.uniform(kq, (Q,), minval=-0.1, maxval=0.1, dtype=jnp.float32)

    out = jax.block_until_ready(additive_attention(x, weight, bias, query))
    ref = additive_attention_ref(x, weight, bias, query)
    assert out.shape == (B, D)
    # exact softmax division now; 1e-4 tolerance only covers HW matmul /
    # transcendental rounding differences vs the XLA reference
    assert jnp.allclose(out, ref, atol=1e-4, rtol=1e-4), float(jnp.max(jnp.abs(out - ref)))

    # second check: batch not a multiple of 8 and seq not a multiple of 8
    # exercises both padding paths (batch padding + masked seq padding)
    B2, S2 = 5, 6
    x2 = jax.random.normal(kx2, (B2, S2, D), dtype=jnp.float32)
    out2 = jax.block_until_ready(additive_attention(x2, weight, bias, query))
    ref2 = additive_attention_ref(x2, weight, bias, query)
    assert out2.shape == (B2, D)
    assert jnp.allclose(out2, ref2, atol=1e-4, rtol=1e-4), float(jnp.max(jnp.abs(out2 - ref2)))

    print("KERNEL_OK")
</pallas_src>

<mosaic_0001>
module attributes {stable_mosaic.version = 11 : i64} {
  func.func @_additive_attention_kernel(%arg0: i32, %arg1: memref<8x8x32xf32, #tpu.memory_space<vmem>>, %arg2: memref<32x16xf32, #tpu.memory_space<vmem>>, %arg3: memref<1x16xf32, #tpu.memory_space<vmem>>, %arg4: memref<1x16xf32, #tpu.memory_space<vmem>>, %arg5: memref<8x32xf32, #tpu.memory_space<vmem>>) attributes {dimension_semantics = [#tpu.dimension_semantics<parallel>], iteration_bounds = array<i64: 2>, scalar_prefetch = 0 : i64, scratch_operands = 0 : i64, tpu.core_type = #tpu.core_type<tc>, window_params = [{transform_indices = @transform_0, window_bounds = array<i64: 8, 8, 32>}, {pipeline_mode = #tpu.pipeline_mode<synchronous>, transform_indices = @transform_1, window_bounds = array<i64: 32, 16>}, {pipeline_mode = #tpu.pipeline_mode<synchronous>, transform_indices = @transform_2, window_bounds = array<i64: 1, 16>}, {pipeline_mode = #tpu.pipeline_mode<synchronous>, transform_indices = @transform_3, window_bounds = array<i64: 1, 16>}, {transform_indices = @transform_4, window_bounds = array<i64: 8, 32>}]} {
    %c0 = arith.constant 0 : index
    %c0_0 = arith.constant 0 : index
    %c0_1 = arith.constant 0 : index
    %0 = vector.load %arg1[%c0, %c0_0, %c0_1] : memref<8x8x32xf32, #tpu.memory_space<vmem>>, vector<8x8x32xf32>
    %1 = vector.shape_cast %0 : vector<8x8x32xf32> to vector<64x32xf32>
    %c0_2 = arith.constant 0 : index
    %c0_3 = arith.constant 0 : index
    %2 = vector.load %arg2[%c0_2, %c0_3] : memref<32x16xf32, #tpu.memory_space<vmem>>, vector<32x16xf32>
    %cst = arith.constant dense<0.000000e+00> : vector<64x16xf32>
    %3 = tpu.matmul %1, %2, %cst {dimension_numbers = #tpu.dot_dimension_numbers<[1], [0], [0], [1], [0, 0, 1, 1], [], []>} : vector<64x32xf32>, vector<32x16xf32>, vector<64x16xf32> -> vector<64x16xf32>
    %c0_4 = arith.constant 0 : index
    %c0_5 = arith.constant 0 : index
    %4 = vector.load %arg3[%c0_4, %c0_5] : memref<1x16xf32, #tpu.memory_space<vmem>>, vector<1x16xf32>
    %5 = vector.broadcast %4 : vector<1x16xf32> to vector<64x16xf32>
    %6 = arith.addf %3, %5 : vector<64x16xf32>
    %7 = math.tanh %6 : vector<64x16xf32>
    %8 = vector.shape_cast %7 : vector<64x16xf32> to vector<8x8x16xf32>
    %c0_6 = arith.constant 0 : index
    %c0_7 = arith.constant 0 : index
    %9 = vector.load %arg4[%c0_6, %c0_7] : memref<1x16xf32, #tpu.memory_space<vmem>>, vector<1x16xf32>
    %10 = vector.shape_cast %9 : vector<1x16xf32> to vector<1x1x16xf32>
    %11 = vector.broadcast %10 : vector<1x1x16xf32> to vector<8x8x16xf32>
    %12 = arith.mulf %8, %11 : vector<8x8x16xf32>
    %cst_8 = arith.constant dense<0.000000e+00> : vector<8x8xf32>
    %13 = vector.multi_reduction <add>, %12, %cst_8 [2] : vector<8x8x16xf32> to vector<8x8xf32>
    %cst_9 = arith.constant dense<0xFF800000> : vector<8xf32>
    %14 = vector.multi_reduction <maximumf>, %13, %cst_9 [1] : vector<8x8xf32> to vector<8xf32>
    %15 = vector.shape_cast %14 : vector<8xf32> to vector<8x1xf32>
    %16 = vector.broadcast %15 : vector<8x1xf32> to vector<8x8xf32>
    %17 = arith.subf %13, %16 : vector<8x8xf32>
    %18 = math.exp %17 : vector<8x8xf32>
    %cst_10 = arith.constant dense<0.000000e+00> : vector<8xf32>
    %19 = vector.multi_reduction <add>, %18, %cst_10 [1] : vector<8x8xf32> to vector<8xf32>
    %20 = vector.shape_cast %19 : vector<8xf32> to vector<8x1xf32>
    %21 = vector.broadcast %20 : vector<8x1xf32> to vector<8x8xf32>
    %22 = arith.divf %18, %21 : vector<8x8xf32>
    %23 = vector.extract_strided_slice %22 {offsets = [0, 0], sizes = [8, 1], strides = [1, 1]} : vector<8x8xf32> to vector<8x1xf32>
    %c0_11 = arith.constant 0 : index
    %c0_12 = arith.constant 0 : index
    %c0_13 = arith.constant 0 : index
    %24 = vector.load %arg1[%c0_11, %c0_12, %c0_13] : memref<8x8x32xf32, #tpu.memory_space<vmem>>, vector<8x1x32xf32>
    %25 = vector.shape_cast %24 : vector<8x1x32xf32> to vector<8x32xf32>
    %26 = vector.broadcast %23 : vector<8x1xf32> to vector<8x32xf32>
    %27 = arith.mulf %26, %25 : vector<8x32xf32>
    %28 = vector.extract_strided_slice %22 {offsets = [0, 1], sizes = [8, 1], strides = [1, 1]} : vector<8x8xf32> to vector<8x1xf32>
    %c0_14 = arith.constant 0 : index
    %c1 = arith.constant 1 : index
    %c0_15 = arith.constant 0 : index
    %29 = vector.load %arg1[%c0_14, %c1, %c0_15] : memref<8x8x32xf32, #tpu.memory_space<vmem>>, vector<8x1x32xf32>
    %30 = vector.shape_cast %29 : vector<8x1x32xf32> to vector<8x32xf32>
    %31 = vector.broadcast %28 : vector<8x1xf32> to vector<8x32xf32>
    %32 = arith.mulf %31, %30 : vector<8x32xf32>
    %33 = arith.addf %27, %32 : vector<8x32xf32>
    %34 = vector.extract_strided_slice %22 {offsets = [0, 2], sizes = [8, 1], strides = [1, 1]} : vector<8x8xf32> to vector<8x1xf32>
    %c0_16 = arith.constant 0 : index
    %c2 = arith.constant 2 : index
    %c0_17 = arith.constant 0 : index
    %35 = vector.load %arg1[%c0_16, %c2, %c0_17] : memref<8x8x32xf32, #tpu.memory_space<vmem>>, vector<8x1x32xf32>
    %36 = vector.shape_cast %35 : vector<8x1x32xf32> to vector<8x32xf32>
    %37 = vector.broadcast %34 : vector<8x1xf32> to vector<8x32xf32>
    %38 = arith.mulf %37, %36 : vector<8x32xf32>
    %39 = arith.addf %33, %38 : vector<8x32xf32>
    %40 = vector.extract_strided_slice %22 {offsets = [0, 3], sizes = [8, 1], strides = [1, 1]} : vector<8x8xf32> to vector<8x1xf32>
    %c0_18 = arith.constant 0 : index
    %c3 = arith.constant 3 : index
    %c0_19 = arith.constant 0 : index
    %41 = vector.load %arg1[%c0_18, %c3, %c0_19] : memref<8x8x32xf32, #tpu.memory_space<vmem>>, vector<8x1x32xf32>
    %42 = vector.shape_cast %41 : vector<8x1x32xf32> to vector<8x32xf32>
    %43 = vector.broadcast %40 : vector<8x1xf32> to vector<8x32xf32>
    %44 = arith.mulf %43, %42 : vector<8x32xf32>
    %45 = arith.addf %39, %44 : vector<8x32xf32>
    %46 = vector.extract_strided_slice %22 {offsets = [0, 4], sizes = [8, 1], strides = [1, 1]} : vector<8x8xf32> to vector<8x1xf32>
    %c0_20 = arith.constant 0 : index
    %c4 = arith.constant 4 : index
    %c0_21 = arith.constant 0 : index
    %47 = vector.load %arg1[%c0_20, %c4, %c0_21] : memref<8x8x32xf32, #tpu.memory_space<vmem>>, vector<8x1x32xf32>
    %48 = vector.shape_cast %47 : vector<8x1x32xf32> to vector<8x32xf32>
    %49 = vector.broadcast %46 : vector<8x1xf32> to vector<8x32xf32>
    %50 = arith.mulf %49, %48 : vector<8x32xf32>
    %51 = arith.addf %45, %50 : vector<8x32xf32>
    %52 = vector.extract_strided_slice %22 {offsets = [0, 5], sizes = [8, 1], strides = [1, 1]} : vector<8x8xf32> to vector<8x1xf32>
    %c0_22 = arith.constant 0 : index
    %c5 = arith.constant 5 : index
    %c0_23 = arith.constant 0 : index
    %53 = vector.load %arg1[%c0_22, %c5, %c0_23] : memref<8x8x32xf32, #tpu.memory_space<vmem>>, vector<8x1x32xf32>
    %54 = vector.shape_cast %53 : vector<8x1x32xf32> to vector<8x32xf32>
    %55 = vector.broadcast %52 : vector<8x1xf32> to vector<8x32xf32>
    %56 = arith.mulf %55, %54 : vector<8x32xf32>
    %57 = arith.addf %51, %56 : vector<8x32xf32>
    %58 = vector.extract_strided_slice %22 {offsets = [0, 6], sizes = [8, 1], strides = [1, 1]} : vector<8x8xf32> to vector<8x1xf32>
    %c0_24 = arith.constant 0 : index
    %c6 = arith.constant 6 : index
    %c0_25 = arith.constant 0 : index
    %59 = vector.load %arg1[%c0_24, %c6, %c0_25] : memref<8x8x32xf32, #tpu.memory_space<vmem>>, vector<8x1x32xf32>
    %60 = vector.shape_cast %59 : vector<8x1x32xf32> to vector<8x32xf32>
    %61 = vector.broadcast %58 : vector<8x1xf32> to vector<8x32xf32>
    %62 = arith.mulf %61, %60 : vector<8x32xf32>
    %63 = arith.addf %57, %62 : vector<8x32xf32>
    %64 = vector.extract_strided_slice %22 {offsets = [0, 7], sizes = [8, 1], strides = [1, 1]} : vector<8x8xf32> to vector<8x1xf32>
    %c0_26 = arith.constant 0 : index
    %c7 = arith.constant 7 : index
    %c0_27 = arith.constant 0 : index
    %65 = vector.load %arg1[%c0_26, %c7, %c0_27] : memref<8x8x32xf32, #tpu.memory_space<vmem>>, vector<8x1x32xf32>
    %66 = vector.shape_cast %65 : vector<8x1x32xf32> to vector<8x32xf32>
    %67 = vector.broadcast %64 : vector<8x1xf32> to vector<8x32xf32>
    %68 = arith.mulf %67, %66 : vector<8x32xf32>
    %69 = arith.addf %63, %68 : vector<8x32xf32>
    %c0_28 = arith.constant 0 : index
    %c0_29 = arith.constant 0 : index
    %70 = vector.load %arg5[%c0_28, %c0_29] : memref<8x32xf32, #tpu.memory_space<vmem>>, vector<8x32xf32>
    tpu.vector_store %arg5[%c0_28, %c0_29], %69 {strides = array<i32>} : memref<8x32xf32, #tpu.memory_space<vmem>>, vector<8x32xf32>,
    return
  }
  func.func @transform_0(%arg0: i32) -> (i32, i32, i32) {
    %c0_i32 = arith.constant 0 : i32
    %c0_i32_0 = arith.constant 0 : i32
    %c0_i32_1 = arith.constant 0 : i32
    return %arg0, %c0_i32, %c0_i32_0 : i32, i32, i32
  }
  func.func @transform_1(%arg0: i32) -> (i32, i32) {
    %c0_i32 = arith.constant 0 : i32
    %c0_i32_0 = arith.constant 0 : i32
    %c0_i32_1 = arith.constant 0 : i32
    return %c0_i32, %c0_i32_0 : i32, i32
  }
  func.func @transform_2(%arg0: i32) -> (i32, i32) {
    %c0_i32 = arith.constant 0 : i32
    %c0_i32_0 = arith.constant 0 : i32
    %c0_i32_1 = arith.constant 0 : i32
    return %c0_i32, %c0_i32_0 : i32, i32
  }
  func.func @transform_3(%arg0: i32) -> (i32, i32) {
    %c0_i32 = arith.constant 0 : i32
    %c0_i32_0 = arith.constant 0 : i32
    %c0_i32_1 = arith.constant 0 : i32
    return %c0_i32, %c0_i32_0 : i32, i32
  }
  func.func @transform_4(%arg0: i32) -> (i32, i32) {
    %c0_i32 = arith.constant 0 : i32
    %c0_i32_0 = arith.constant 0 : i32
    return %arg0, %c0_i32 : i32, i32
  }
}

</mosaic_0001>

<llo_original>
// kernel: tpu_custom_call.1
$region0: #{tpu_custom_call.1}
  #allocation0 [shape = 'u32[]', space=smem, size = 0x4, offset = 0x4, fixed_abs, tag = 'smem constant byte address 0x4 - core index']
  #allocation1 [shape = 'u32[72,128]{1,0:T(1,128)}', space=vmem, size = 0x9000, scoped, tag = 'internal scratch']
  %s0 = inlined_call_operand.hbm [shape: f32[16,8,32], index: 0, kind: input, shape index: {}]
  %s1 = inlined_call_operand.vmem [shape: f32[32,16], index: 1, kind: input, shape index: {}]
  %s2 = inlined_call_operand.vmem [shape: f32[1,16], index: 2, kind: input, shape index: {}]
  %s3 = inlined_call_operand.vmem [shape: f32[1,16], index: 3, kind: input, shape index: {}]
  %s4 = inlined_call_operand.hbm [shape: f32[16,32], index: 4, kind: output, shape index: {}]
  %s5 = sld [smem:[#allocation0]]
  $region53: #{tpu_custom_call.1} parent=0
    _
  %s7 = ssub.s32 1, %s5
  %s8 = scalar_select 0, %s7, %s5
  $region1: #{tpu_custom_call.1} parent=0
    #allocation2 [shape = 'u8[65536]{0}', space=vmem, size = 0x10000, scoped, tag = 'input window, operand 0']
    #allocation3 [shape = 's32[2]{0}', space=sflag, size = 0x8, scoped, tag = 'scoped memory for tpu_custom_call.1']
    #allocation4 [shape = 's32[2]{0}', space=sflag, size = 0x8, scoped, tag = 'scoped memory for tpu_custom_call.1']
    #allocation5 [shape = 'u8[8192]{0}', space=vmem, size = 0x2000, scoped, tag = 'output window, operand 0']
    %9 = vsyncpa [#allocation3], 0
    %s10 = scalar_lea.sflag [#allocation3], 1
    %11 = vsyncpa %s10, 0
    %12 = vsyncpa [#allocation4], 0
    %s13 = scalar_lea.sflag [#allocation4], 1
    %14 = vsyncpa %s13, 0
    loop: start=0, step=1, limit=4
    $region2: #{tpu_custom_call.1} parent=1 // loop_pre_header
      _
    $region3: #{tpu_custom_call.1} parent=1 // loop_header
      %s16 = sphi 0, %s20
      %p17 = scmp.ge.s32.totalorder %s16, 4
      %s26 = sphi 0, %s28
      %s29 = sphi 0, %s26
      %s30 = sphi 0, %s29
      %s46 = sphi 0, %s30
      %s50 = sphi 0, %s50
      %s52 = sphi 0, %s50
      %s53 = sphi 0, %s52
      %s67 = sphi 0, %s53
      %s71 = sphi 0, %s71
      %s73 = sphi 0, %s71
      %s74 = sphi 0, %s73
      %s88 = sphi 0, %s74
      %s92 = sphi 0, %s92
      %s94 = sphi 0, %s92
      %s95 = sphi 0, %s94
      %s109 = sphi 0, %s95
      %s115 = sphi 0, %s117
      %s118 = sphi 0, %s115
      %s119 = sphi 0, %s118
      %s135 = sphi 0, %s119
    $region4: #{tpu_custom_call.1} parent=1 // loop_header_branch
      %19 = sbr.rel (%p17) target = $region8
    $region5: #{tpu_custom_call.1} parent=1 // loop_body
      %s21 = ssub.s32 %s16, 1
      %s22 = ssub.s32 %s16, 2
      %s23 = sadd.s32 %s16, 1
      %s24 = ssub.s32 %s16, %s23
      %p25 = scmp.eq.s32.totalorder %s24, 0
      %s27 = sadd.s32 %s26, 1
      %s28 = scalar_select %p25, %s26, %s27
      %p31 = pneg %p25
      %p32 = scmp.eq.s32.totalorder %s16, 1
      %p33 = por %p31, %p32
      %p34 = scmp.ne.s32.totalorder %s26, %s29
      %p35 = scmp.eq.s32.totalorder %s16, 0
      %p36 = por %p34, %p35
      %p37 = scmp.ne.s32.totalorder %s26, %s29
      %p38 = scmp.eq.s32.totalorder %s21, 1
      %p39 = por %p37, %p38
      %p40 = scmp.ne.s32.totalorder %s29, %s30
      %p41 = scmp.eq.s32.totalorder %s21, 0
      %p42 = por %p40, %p41
      %p43 = scmp.ne.s32.totalorder %s29, %s30
      %p44 = scmp.eq.s32.totalorder %s22, 1
      %p45 = por %p43, %p44
      %p47 = scmp.ne.s32.totalorder %s30, %s46
      %p48 = scmp.eq.s32.totalorder %s22, 0
      %p49 = por %p47, %p48
      %s51 = sadd.s32 %s50, 1
      %p54 = scmp.eq.s32.totalorder %s16, 1
      %p55 = scmp.ne.s32.totalorder %s50, %s52
      %p56 = scmp.eq.s32.totalorder %s16, 0
      %p57 = por %p55, %p56
      %p58 = scmp.ne.s32.totalorder %s50, %s52
      %p59 = scmp.eq.s32.totalorder %s21, 1
      %p60 = por %p58, %p59
      %p61 = scmp.ne.s32.totalorder %s52, %s53
      %p62 = scmp.eq.s32.totalorder %s21, 0
      %p63 = por %p61, %p62
      %p64 = scmp.ne.s32.totalorder %s52, %s53
      %p65 = scmp.eq.s32.totalorder %s22, 1
      %p66 = por %p64, %p65
      %p68 = scmp.ne.s32.totalorder %s53, %s67
      %p69 = scmp.eq.s32.totalorder %s22, 0
      %p70 = por %p68, %p69
      %s72 = sadd.s32 %s71, 1
      %p75 = scmp.eq.s32.totalorder %s16, 1
      %p76 = scmp.ne.s32.totalorder %s71, %s73
      %p77 = scmp.eq.s32.totalorder %s16, 0
      %p78 = por %p76, %p77
      %p79 = scmp.ne.s32.totalorder %s71, %s73
      %p80 = scmp.eq.s32.totalorder %s21, 1
      %p81 = por %p79, %p80
      %p82 = scmp.ne.s32.totalorder %s73, %s74
      %p83 = scmp.eq.s32.totalorder %s21, 0
      %p84 = por %p82, %p83
      %p85 = scmp.ne.s32.totalorder %s73, %s74
      %p86 = scmp.eq.s32.totalorder %s22, 1
      %p87 = por %p85, %p86
      %p89 = scmp.ne.s32.totalorder %s74, %s88
      %p90 = scmp.eq.s32.totalorder %s22, 0
      %p91 = por %p89, %p90
      %s93 = sadd.s32 %s92, 1
      %p96 = scmp.eq.s32.totalorder %s16, 1
      %p97 = scmp.ne.s32.totalorder %s92, %s94
      %p98 = scmp.eq.s32.totalorder %s16, 0
      %p99 = por %p97, %p98
      %p100 = scmp.ne.s32.totalorder %s92, %s94
      %p101 = scmp.eq.s32.totalorder %s21, 1
      %p102 = por %p100, %p101
      %p103 = scmp.ne.s32.totalorder %s94, %s95
      %p104 = scmp.eq.s32.totalorder %s21, 0
      %p105 = por %p103, %p104
      %p106 = scmp.ne.s32.totalorder %s94, %s95
      %p107 = scmp.eq.s32.totalorder %s22, 1
      %p108 = por %p106, %p107
      %p110 = scmp.ne.s32.totalorder %s95, %s109
      %p111 = scmp.eq.s32.totalorder %s22, 0
      %p112 = por %p110, %p111
      %s113 = ssub.s32 %s16, %s23
      %p114 = scmp.eq.s32.totalorder %s113, 0
      %s116 = sadd.s32 %s115, 1
      %s117 = scalar_select %p114, %s115, %s116
      %p120 = pneg %p114
      %p121 = scmp.eq.s32.totalorder %s16, 1
      %p122 = por %p120, %p121
      %p123 = scmp.ne.s32.totalorder %s115, %s118
      %p124 = scmp.eq.s32.totalorder %s16, 0
      %p125 = por %p123, %p124
      %p126 = scmp.ne.s32.totalorder %s115, %s118
      %p127 = scmp.eq.s32.totalorder %s21, 1
      %p128 = por %p126, %p127
      %p129 = scmp.ne.s32.totalorder %s118, %s119
      %p130 = scmp.eq.s32.totalorder %s21, 0
      %p131 = por %p129, %p130
      %p132 = scmp.ne.s32.totalorder %s118, %s119
      %p133 = scmp.eq.s32.totalorder %s22, 1
      %p134 = por %p132, %p133
      %p136 = scmp.ne.s32.totalorder %s119, %s135
      %p137 = scmp.eq.s32.totalorder %s22, 0
      %p138 = por %p136, %p137
      %p139 = scmp.le.s32.totalorder 1, %s16
      %p140 = scmp.lt.s32.totalorder %s16, 3
      %p141 = pnand %p139, %p140
      %p142 = pneg %p141
      // Predicated region
      $region9: #{tpu_custom_call.1} parent=5 // pred_check
        _
      $region10: #{tpu_custom_call.1} parent=5 // pred_check_branch
        %144 = sbr.rel (%p141) target = $region12
      $region11: #{tpu_custom_call.1} parent=5 // pred_region
        %s145 = ssub.s32 %s16, 1
        // Predicated region
        $region13: #{tpu_custom_call.1} parent=11 // pred_check
          %p146 = pneg %p63
        $region14: #{tpu_custom_call.1} parent=11 // pred_check_branch
          %148 = sbr.rel (%p146) target = $region16
        $region15: #{tpu_custom_call.1} parent=11 // pred_region
          _
        $region16: #{tpu_custom_call.1} parent=11 // pred_fallthru
          _
        // Predicated region
        $region17: #{tpu_custom_call.1} parent=11 // pred_check
          %p149 = pneg %p84
        $region18: #{tpu_custom_call.1} parent=11 // pred_check_branch
          %151 = sbr.rel (%p149) target = $region20
        $region19: #{tpu_custom_call.1} parent=11 // pred_region
          _
        $region20: #{tpu_custom_call.1} parent=11 // pred_fallthru
          _
        // Predicated region
        $region21: #{tpu_custom_call.1} parent=11 // pred_check
          %p152 = pneg %p105
        $region22: #{tpu_custom_call.1} parent=11 // pred_check_branch
          %154 = sbr.rel (%p152) target = $region24
        $region23: #{tpu_custom_call.1} parent=11 // pred_region
          _
        $region24: #{tpu_custom_call.1} parent=11 // pred_fallthru
          _
      $region12: #{tpu_custom_call.1} parent=5 // pred_fallthru
        _
      %p155 = scmp.lt.s32.totalorder %s16, 2
      // Predicated region
      $region25: #{tpu_custom_call.1} parent=5 // pred_check
        %p156 = pneg %p155
      $region26: #{tpu_custom_call.1} parent=5 // pred_check_branch
        %158 = sbr.rel (%p156) target = $region28
      $region27: #{tpu_custom_call.1} parent=5 // pred_region
        // Predicated region
        $region29: #{tpu_custom_call.1} parent=27 // pred_check
          %p159 = pneg %p36
        $region30: #{tpu_custom_call.1} parent=27 // pred_check_branch
          %161 = sbr.rel (%p159) target = $region32
        $region31: #{tpu_custom_call.1} parent=27 // pred_region
          %s162 = sand.u32 %s26, 1
          %s163 = scalar_lea.sflag [#allocation3], %s162
          %s164 = sand.u32 %s26, 1
          %s165 = smul.addr %s164, 64
          %s166 = scalar_lea.vmem [#allocation2], %s165
          %s167 = smul.u32 8, %s16
          %169 = vsyncadd %s163, 0
          %s170 = smul.addr %s167, 8
          %s171 = scalar_lea.hbm %s0, %s170
          %s172 = sshll.u32 %s171, 4
          %s173 = int_to_ptr.hbm [resolvable:$true] %s172
          %s174 = sshll.u32 %s166, 4
          %s175 = int_to_ptr.vmem [resolvable:$true] %s174
          %180 = dma.hbm_to_vmem [thread:$0]  %s173, 1024, %s175, %s163, 128, 128, 8
        $region32: #{tpu_custom_call.1} parent=27 // pred_fallthru
          _
      $region28: #{tpu_custom_call.1} parent=5 // pred_fallthru
        _
      %p181 = scmp.le.s32.totalorder 1, %s16
      %p182 = scmp.lt.s32.totalorder %s16, 3
      %p183 = pnand %p181, %p182
      %p184 = pneg %p183
      // Predicated region
      $region33: #{tpu_custom_call.1} parent=5 // pred_check
        _
      $region34: #{tpu_custom_call.1} parent=5 // pred_check_branch
        %186 = sbr.rel (%p183) target = $region36
      $region35: #{tpu_custom_call.1} parent=5 // pred_region
        %s187 = ssub.s32 %s16, 1
        %s188 = sand.u32 %s29, 1
        %s189 = scalar_lea.sflag [#allocation3], %s188
        %s190 = sand.u32 %s29, 1
        %s191 = smul.addr %s190, 64
        %s192 = scalar_lea.vmem [#allocation2], %s191
        // Predicated region
        $region37: #{tpu_custom_call.1} parent=35 // pred_check
          %p193 = pneg %p42
        $region38: #{tpu_custom_call.1} parent=35 // pred_check_branch
          %195 = sbr.rel (%p193) target = $region40
        $region39: #{tpu_custom_call.1} parent=35 // pred_region
          %197 = dma.done %s189, 1024
        $region40: #{tpu_custom_call.1} parent=35 // pred_fallthru
          _
        %s198 = sand.u32 %s29, 1
        %s199 = scalar_lea.sflag [#allocation3], %s198
        %s200 = sand.u32 %s29, 1
        %s201 = smul.addr %s200, 64
        %s202 = scalar_lea.vmem [#allocation2], %s201
        %p203 = pneg %p42
        %p204 = pneg %p39
        %p205 = pneg %p63
        %p206 = pneg %p60
        %p207 = pneg %p84
        %p208 = pneg %p81
        %p209 = pneg %p105
        %p210 = pneg %p102
        %p211 = pneg %p131
        %p212 = pneg %p128
        %s213 = sand.u32 %s118, 1
        %s214 = scalar_lea.sflag [#allocation4], %s213
        %s215 = sand.u32 %s118, 1
        %s216 = smul.addr %s215, 8
        %s217 = scalar_lea.vmem [#allocation5], %s216
        %s218 = smul.u32 8, %s21
        %v219 = vld [vmem:[%s192] sm:$0xff]
        %v220 = vld [vmem:[%s192 + $0x8] sm:$0xff]
        %v221 = vld [vmem:[%s192 + $0x10] sm:$0xff]
        %v222 = vld [vmem:[%s192 + $0x18] sm:$0xff]
        %v223 = vld [vmem:[%s192 + $0x20] sm:$0xff]
        %v224 = vld [vmem:[%s192 + $0x28] sm:$0xff]
        %v225 = vld [vmem:[%s192 + $0x30] sm:$0xff]
        %v226 = vld [vmem:[%s192 + $0x38] sm:$0xff]
        %v227 = vld [vmem:[%s1] sm:$0xff]
        %v228 = vld [vmem:[%s1 + $0x8] sm:$0xff]
        %v229 = vld [vmem:[%s1 + $0x10] sm:$0xff]
        %v230 = vld [vmem:[%s1 + $0x18] sm:$0xff]
        %v231 = vld [vmem:[%s2] sm:$0x1]
        %v233 = vperm.slane %v231, 0
        %vm235 = vcmask 261120
        %v237 = vsel %vm235, %v219, 0
        %v240 = vsel %vm235, %v220, 0
        %v243 = vsel %vm235, %v221, 0
        %v246 = vsel %vm235, %v222, 0
        %v249 = vsel %vm235, %v223, 0
        %v252 = vsel %vm235, %v224, 0
        %v255 = vsel %vm235, %v225, 0
        %v258 = vsel %vm235, %v226, 0
        %260 = vmatpush.msra.mxu0 0.0
        %261 = vmatpush.msra.mxu0 0.0
        %262 = vmatpush.msra.mxu0 0.0
        %263 = vmatpush.msra.mxu0 0.0
        %264 = vmatpush.msra.mxu0 0.0
        %265 = vmatpush.msra.mxu0 0.0
        %266 = vmatpush.msra.mxu0 0.0
        %267 = vmatpush.msra.mxu0 0.0
        %268 = vmatpush.msra.mxu0 0.0
        %269 = vmatpush.msra.mxu0 0.0
        %270 = vmatpush.msra.mxu0 0.0
        %271 = vmatpush.msra.mxu0 0.0
        %272 = vmatpush.msra.mxu0 %v230
        %273 = vmatpush.msra.mxu0 %v229
        %274 = vmatpush.msra.mxu0 %v228
        %275 = vmatpush.msra.mxu0 %v227
        %276 = vmatmul.f32.gmra.mxu0 %v237
        %v277 = vpop.f32.mrf.mxu0
        %v278 = vadd.f32 %v233, %v277
        %279 = vmatmul.f32.gmra.mxu0 %v240
        %v280 = vpop.f32.mrf.mxu0
        %v281 = vadd.f32 %v233, %v280
        %282 = vmatmul.f32.gmra.mxu0 %v243
        %v283 = vpop.f32.mrf.mxu0
        %v284 = vadd.f32 %v233, %v283
        %285 = vmatmul.f32.gmra.mxu0 %v246
        %v286 = vpop.f32.mrf.mxu0
        %v287 = vadd.f32 %v233, %v286
        %288 = vmatmul.f32.gmra.mxu0 %v249
        %v289 = vpop.f32.mrf.mxu0
        %v290 = vadd.f32 %v233, %v289
        %291 = vmatmul.f32.gmra.mxu0 %v252
        %v292 = vpop.f32.mrf.mxu0
        %v293 = vadd.f32 %v233, %v292
        %294 = vmatmul.f32.gmra.mxu0 %v255
        %v295 = vpop.f32.mrf.mxu0
        %v296 = vadd.f32 %v233, %v295
        %297 = vmatmul.f32.gmra.mxu0 %v258
        %v298 = vpop.f32.mrf.mxu0
        %v299 = vadd.f32 %v233, %v298
        %300 = vdwg.mxu0
        %v301 = vtanh.pop %v278
        %v302 = vtanh.pop %v281
        %v303 = vtanh.pop %v284
        %v304 = vtanh.pop %v287
        %v305 = vtanh.pop %v290
        %v306 = vtanh.pop %v293
        %v307 = vtanh.pop %v296
        %v308 = vtanh.pop %v299
        %v309 = vld [vmem:[%s3] sm:$0x1]
        %v311 = vperm.slane %v309, 0
        %v313 = vmul.f32 %v301, %v311
        %v314 = vmul.f32 %v302, %v311
        %v315 = vmul.f32 %v303, %v311
        %v316 = vmul.f32 %v304, %v311
        %v317 = vmul.f32 %v305, %v311
        %v318 = vmul.f32 %v306, %v311
        %v319 = vmul.f32 %v307, %v311
        %v320 = vmul.f32 %v308, %v311
        %vm321 = vcmask 130048
        %v322 = vsel %vm321, %v313, 0.0
        %323 = vadd.xlane.f32.xlu0 %v322
        %v324 = vpop.xlane.xlu0 %323
        %v325 = vsel %vm321, %v314, 0.0
        %326 = vadd.xlane.f32.xlu0 %v325
        %v327 = vpop.xlane.xlu0 %326
        %v328 = vsel %vm321, %v315, 0.0
        %329 = vadd.xlane.f32.xlu0 %v328
        %v330 = vpop.xlane.xlu0 %329
        %v331 = vsel %vm321, %v316, 0.0
        %332 = vadd.xlane.f32.xlu0 %v331
        %v333 = vpop.xlane.xlu0 %332
        %v334 = vsel %vm321, %v317, 0.0
        %335 = vadd.xlane.f32.xlu0 %v334
        %v336 = vpop.xlane.xlu0 %335
        %v337 = vsel %vm321, %v318, 0.0
        %338 = vadd.xlane.f32.xlu0 %v337
        %v339 = vpop.xlane.xlu0 %338
        %v340 = vsel %vm321, %v319, 0.0
        %341 = vadd.xlane.f32.xlu0 %v340
        %v342 = vpop.xlane.xlu0 %341
        %v343 = vsel %vm321, %v320, 0.0
        %344 = vadd.xlane.f32.xlu0 %v343
        %v345 = vpop.xlane.xlu0 %344
        %v354 = vlaneseq
        %v355 = vand.u32 %v354, 127
        %v356 = vperm.slane %v324, %v355
        %v357 = vperm.slane %v327, %v355
        %v358 = vperm.slane %v330, %v355
        %v359 = vperm.slane %v333, %v355
        %v360 = vperm.slane %v336, %v355
        %v361 = vperm.slane %v339, %v355
        %v362 = vperm.slane %v342, %v355
        %v363 = vperm.slane %v345, %v355
        %vm364 = vcmask 1041409
        %v365 = vsel %vm364, %v357, %v356
        %vm366 = vcmask 1042434
        %v367 = vsel %vm366, %v358, %v365
        %vm368 = vcmask 1043459
        %v369 = vsel %vm368, %v359, %v367
        %vm370 = vcmask 1044484
        %v371 = vsel %vm370, %v360, %v369
        %vm372 = vcmask 1045509
        %v373 = vsel %vm372, %v361, %v371
        %vm374 = vcmask 1046534
        %v375 = vsel %vm374, %v362, %v373
        %vm376 = vcmask 1047559
        %v377 = vsel %vm376, %v363, %v375
        %vm379 = vcmask 64512
        %v380 = vsel %vm379, %v377, -inf
        %381 = vmax.xlane.f32.xlu0 %v380
        %v382 = vpop.xlane.xlu0 %381
        %v384 = vperm.slane %v382, 0
        %v385 = vperm.slane %v382, 1
        %v386 = vperm.slane %v382, 2
        %v387 = vperm.slane %v382, 3
        %v388 = vperm.slane %v382, 4
        %v389 = vperm.slane %v382, 5
        %v390 = vperm.slane %v382, 6
        %v391 = vperm.slane %v382, 7
        %v400 = vsub.f32 %v324, %v384
        %v401 = vsub.f32 %v327, %v385
        %v402 = vsub.f32 %v330, %v386
        %v403 = vsub.f32 %v333, %v387
        %v404 = vsub.f32 %v336, %v388
        %v405 = vsub.f32 %v339, %v389
        %v406 = vsub.f32 %v342, %v390
        %v407 = vsub.f32 %v345, %v391
        %v408 = vmul.f32 %v400, 1.442695
        %v409 = vpow.pop %v408
        %v410 = vmul.f32 %v401, 1.442695
        %v411 = vpow.pop %v410
        %v412 = vmul.f32 %v402, 1.442695
        %v413 = vpow.pop %v412
        %v414 = vmul.f32 %v403, 1.442695
        %v415 = vpow.pop %v414
        %v416 = vmul.f32 %v404, 1.442695
        %v417 = vpow.pop %v416
        %v418 = vmul.f32 %v405, 1.442695
        %v419 = vpow.pop %v418
        %v420 = vmul.f32 %v406, 1.442695
        %v421 = vpow.pop %v420
        %v422 = vmul.f32 %v407, 1.442695
        %v423 = vpow.pop %v422
        %432 = vset.pattern.permute.xlu0 0
        %433 = vperm.xlu0 %432, %v409
        %v434 = vpop.permute.xlu0 %433
        %435 = vset.pattern.permute.xlu0 0
        %436 = vperm.xlu0 %435, %v411
        %v437 = vpop.permute.xlu0 %436
        %438 = vset.pattern.permute.xlu0 0
        %439 = vperm.xlu0 %438, %v413
        %v440 = vpop.permute.xlu0 %439
        %441 = vset.pattern.permute.xlu0 0
        %442 = vperm.xlu0 %441, %v415
        %v443 = vpop.permute.xlu0 %442
        %444 = vset.pattern.permute.xlu0 0
        %445 = vperm.xlu0 %444, %v417
        %v446 = vpop.permute.xlu0 %445
        %447 = vset.pattern.permute.xlu0 0
        %448 = vperm.xlu0 %447, %v419
        %v449 = vpop.permute.xlu0 %448
        %450 = vset.pattern.permute.xlu0 0
        %451 = vperm.xlu0 %450, %v421
        %v452 = vpop.permute.xlu0 %451
        %453 = vset.pattern.permute.xlu0 0
        %454 = vperm.xlu0 %453, %v423
        %v455 = vpop.permute.xlu0 %454
        %v456 = vperm.slane %v434, %v355
        %v457 = vperm.slane %v437, %v355
        %v458 = vperm.slane %v440, %v355
        %v459 = vperm.slane %v443, %v355
        %v460 = vperm.slane %v446, %v355
        %v461 = vperm.slane %v449, %v355
        %v462 = vperm.slane %v452, %v355
        %v463 = vperm.slane %v455, %v355
        %v464 = vsel %vm364, %v457, %v456
        %v465 = vsel %vm366, %v458, %v464
        %v466 = vsel %vm368, %v459, %v465
        %v467 = vsel %vm370, %v460, %v466
        %v468 = vsel %vm372, %v461, %v467
        %v469 = vsel %vm374, %v462, %v468
        %v470 = vsel %vm376, %v463, %v469
        %v472 = vsel %vm379, %v470, 0.0
        %473 = vadd.xlane.f32.xlu0 %v472
        %v474 = vpop.xlane.xlu0 %473
        %v476 = vperm.slane %v474, 0
        %v477 = vperm.slane %v474, 1
        %v478 = vperm.slane %v474, 2
        %v479 = vperm.slane %v474, 3
        %v480 = vperm.slane %v474, 4
        %v481 = vperm.slane %v474, 5
        %v482 = vperm.slane %v474, 6
        %v483 = vperm.slane %v474, 7
        %v492 = vrcp.pop %v476
        %v493 = vmul.f32 %v476, %v492
        %v494 = vsub.f32 1.0, %v493
        %v495 = vmul.f32 %v492, %v494
        %v496 = vadd.f32 %v492, %v495
        %vm497 = vweird.f32 %v476
        %vm498 = vweird.f32 %v492
        %vm499 = vmor %vm497, %vm498
        %v500 = vsel %vm499, %v492, %v496
        %v501 = vand.u32 2147483647, %v476
        %vm502 = vcmp.eq.f32.partialorder %v501, 8.507059e+37
        %v503 = vand.u32 %v476, 2147483648
        %v504 = vor.u32 1.1754944e-38, %v503
        %v505 = vsel %vm502, %v504, %v500
        %v506 = vmul.f32 %v409, %v505
        %v507 = vrcp.pop %v477
        %v508 = vmul.f32 %v477, %v507
        %v509 = vsub.f32 1.0, %v508
        %v510 = vmul.f32 %v507, %v509
        %v511 = vadd.f32 %v507, %v510
        %vm512 = vweird.f32 %v477
        %vm513 = vweird.f32 %v507
        %vm514 = vmor %vm512, %vm513
        %v515 = vsel %vm514, %v507, %v511
        %v516 = vand.u32 2147483647, %v477
        %vm517 = vcmp.eq.f32.partialorder %v516, 8.507059e+37
        %v518 = vand.u32 %v477, 2147483648
        %v519 = vor.u32 1.1754944e-38, %v518
        %v520 = vsel %vm517, %v519, %v515
        %v521 = vmul.f32 %v411, %v520
        %v522 = vrcp.pop %v478
        %v523 = vmul.f32 %v478, %v522
        %v524 = vsub.f32 1.0, %v523
        %v525 = vmul.f32 %v522, %v524
        %v526 = vadd.f32 %v522, %v525
        %vm527 = vweird.f32 %v478
        %vm528 = vweird.f32 %v522
        %vm529 = vmor %vm527, %vm528
        %v530 = vsel %vm529, %v522, %v526
        %v531 = vand.u32 2147483647, %v478
        %vm532 = vcmp.eq.f32.partialorder %v531, 8.507059e+37
        %v533 = vand.u32 %v478, 2147483648
        %v534 = vor.u32 1.1754944e-38, %v533
        %v535 = vsel %vm532, %v534, %v530
        %v536 = vmul.f32 %v413, %v535
        %v537 = vrcp.pop %v479
        %v538 = vmul.f32 %v479, %v537
        %v539 = vsub.f32 1.0, %v538
        %v540 = vmul.f32 %v537, %v539
        %v541 = vadd.f32 %v537, %v540
        %vm542 = vweird.f32 %v479
        %vm543 = vweird.f32 %v537
        %vm544 = vmor %vm542, %vm543
        %v545 = vsel %vm544, %v537, %v541
        %v546 = vand.u32 2147483647, %v479
        %vm547 = vcmp.eq.f32.partialorder %v546, 8.507059e+37
        %v548 = vand.u32 %v479, 2147483648
        %v549 = vor.u32 1.1754944e-38, %v548
        %v550 = vsel %vm547, %v549, %v545
        %v551 = vmul.f32 %v415, %v550
        %v552 = vrcp.pop %v480
        %v553 = vmul.f32 %v480, %v552
        %v554 = vsub.f32 1.0, %v553
        %v555 = vmul.f32 %v552, %v554
        %v556 = vadd.f32 %v552, %v555
        %vm557 = vweird.f32 %v480
        %vm558 = vweird.f32 %v552
        %vm559 = vmor %vm557, %vm558
        %v560 = vsel %vm559, %v552, %v556
        %v561 = vand.u32 2147483647, %v480
        %vm562 = vcmp.eq.f32.partialorder %v561, 8.507059e+37
        %v563 = vand.u32 %v480, 2147483648
        %v564 = vor.u32 1.1754944e-38, %v563
        %v565 = vsel %vm562, %v564, %v560
        %v566 = vmul.f32 %v417, %v565
        %v567 = vrcp.pop %v481
        %v568 = vmul.f32 %v481, %v567
        %v569 = vsub.f32 1.0, %v568
        %v570 = vmul.f32 %v567, %v569
        %v571 = vadd.f32 %v567, %v570
        %vm572 = vweird.f32 %v481
        %vm573 = vweird.f32 %v567
        %vm574 = vmor %vm572, %vm573
        %v575 = vsel %vm574, %v567, %v571
        %v576 = vand.u32 2147483647, %v481
        %vm577 = vcmp.eq.f32.partialorder %v576, 8.507059e+37
        %v578 = vand.u32 %v481, 2147483648
        %v579 = vor.u32 1.1754944e-38, %v578
        %v580 = vsel %vm577, %v579, %v575
        %v581 = vmul.f32 %v419, %v580
        %v582 = vrcp.pop %v482
        %v583 = vmul.f32 %v482, %v582
        %v584 = vsub.f32 1.0, %v583
        %v585 = vmul.f32 %v582, %v584
        %v586 = vadd.f32 %v582, %v585
        %vm587 = vweird.f32 %v482
        %vm588 = vweird.f32 %v582
        %vm589 = vmor %vm587, %vm588
        %v590 = vsel %vm589, %v582, %v586
        %v591 = vand.u32 2147483647, %v482
        %vm592 = vcmp.eq.f32.partialorder %v591, 8.507059e+37
        %v593 = vand.u32 %v482, 2147483648
        %v594 = vor.u32 1.1754944e-38, %v593
        %v595 = vsel %vm592, %v594, %v590
        %v596 = vmul.f32 %v421, %v595
        %v597 = vrcp.pop %v483
        %v598 = vmul.f32 %v483, %v597
        %v599 = vsub.f32 1.0, %v598
        %v600 = vmul.f32 %v597, %v599
        %v601 = vadd.f32 %v597, %v600
        %vm602 = vweird.f32 %v483
        %vm603 = vweird.f32 %v597
        %vm604 = vmor %vm602, %vm603
        %v605 = vsel %vm604, %v597, %v601
        %v606 = vand.u32 2147483647, %v483
        %vm607 = vcmp.eq.f32.partialorder %v606, 8.507059e+37
        %v608 = vand.u32 %v483, 2147483648
        %v609 = vor.u32 1.1754944e-38, %v608
        %v610 = vsel %vm607, %v609, %v605
        %v611 = vmul.f32 %v423, %v610
        %v612 = vld [vmem:[%s192] sm:$0x1]
        %v613 = vld [vmem:[%s192 + $0x8] sm:$0x1]
        %v614 = vld [vmem:[%s192 + $0x10] sm:$0x1]
        %v615 = vld [vmem:[%s192 + $0x18] sm:$0x1]
        %v616 = vld [vmem:[%s192 + $0x20] sm:$0x1]
        %v617 = vld [vmem:[%s192 + $0x28] sm:$0x1]
        %v618 = vld [vmem:[%s192 + $0x30] sm:$0x1]
        %v619 = vld [vmem:[%s192 + $0x38] sm:$0x1]
        %v620 = vperm.slane %v506, 0
        %v621 = vperm.slane %v521, 0
        %v622 = vperm.slane %v536, 0
        %v623 = vperm.slane %v551, 0
        %v624 = vperm.slane %v566, 0
        %v625 = vperm.slane %v581, 0
        %v626 = vperm.slane %v596, 0
        %v627 = vperm.slane %v611, 0
        %v636 = vperm.slane %v612, 0
        %v637 = vlaneseq
        %v638 = vshrl.u32 %v637, 7
        %640 = vset.pattern.permute.xlu0 %v638
        %641 = vperm.xlu0 %640, %v636
        %v642 = vpop.permute.xlu0 %641
        %v643 = vlaneseq
        %v644 = vshrl.u32 %v643, 7
        %v645 = vadd.s32 %v644, 8
        %646 = vset.pattern.permute.xlu0 %v645
        %647 = vperm.xlu0 %646, %v636
        %v648 = vpop.permute.xlu0 %647
        %v649 = vlaneseq
        %v650 = vshrl.u32 %v649, 7
        %v651 = vadd.s32 %v650, 16
        %652 = vset.pattern.permute.xlu0 %v651
        %653 = vperm.xlu0 %652, %v636
        %v654 = vpop.permute.xlu0 %653
        %v655 = vlaneseq
        %v656 = vshrl.u32 %v655, 7
        %v657 = vadd.s32 %v656, 24
        %658 = vset.pattern.permute.xlu0 %v657
        %659 = vperm.xlu0 %658, %v636
        %v660 = vpop.permute.xlu0 %659
        %v661 = vperm.slane %v613, 0
        %v662 = vlaneseq
        %v663 = vshrl.u32 %v662, 7
        %665 = vset.pattern.permute.xlu0 %v663
        %666 = vperm.xlu0 %665, %v661
        %v667 = vpop.permute.xlu0 %666
        %v668 = vlaneseq
        %v669 = vshrl.u32 %v668, 7
        %v670 = vadd.s32 %v669, 8
        %671 = vset.pattern.permute.xlu0 %v670
        %672 = vperm.xlu0 %671, %v661
        %v673 = vpop.permute.xlu0 %672
        %v674 = vlaneseq
        %v675 = vshrl.u32 %v674, 7
        %v676 = vadd.s32 %v675, 16
        %677 = vset.pattern.permute.xlu0 %v676
        %678 = vperm.xlu0 %677, %v661
        %v679 = vpop.permute.xlu0 %678
        %v680 = vlaneseq
        %v681 = vshrl.u32 %v680, 7
        %v682 = vadd.s32 %v681, 24
        %683 = vset.pattern.permute.xlu0 %v682
        %684 = vperm.xlu0 %683, %v661
        %v685 = vpop.permute.xlu0 %684
        %v686 = vperm.slane %v614, 0
        %v687 = vlaneseq
        %v688 = vshrl.u32 %v687, 7
        %690 = vset.pattern.permute.xlu0 %v688
        %691 = vperm.xlu0 %690, %v686
        %v692 = vpop.permute.xlu0 %691
        %v693 = vlaneseq
        %v694 = vshrl.u32 %v693, 7
        %v695 = vadd.s32 %v694, 8
        %696 = vset.pattern.permute.xlu0 %v695
        %697 = vperm.xlu0 %696, %v686
        %v698 = vpop.permute.xlu0 %697
        %v699 = vlaneseq
        %v700 = vshrl.u32 %v699, 7
        %v701 = vadd.s32 %v700, 16
        %702 = vset.pattern.permute.xlu0 %v701
        %703 = vperm.xlu0 %702, %v686
        %v704 = vpop.permute.xlu0 %703
        %v705 = vlaneseq
        %v706 = vshrl.u32 %v705, 7
        %v707 = vadd.s32 %v706, 24
        %708 = vset.pattern.permute.xlu0 %v707
        %709 = vperm.xlu0 %708, %v686
        %v710 = vpop.permute.xlu0 %709
        %v711 = vperm.slane %v615, 0
        %v712 = vlaneseq
        %v713 = vshrl.u32 %v712, 7
        %715 = vset.pattern.permute.xlu0 %v713
        %716 = vperm.xlu0 %715, %v711
        %v717 = vpop.permute.xlu0 %716
        %v718 = vlaneseq
        %v719 = vshrl.u32 %v718, 7
        %v720 = vadd.s32 %v719, 8
        %721 = vset.pattern.permute.xlu0 %v720
        %722 = vperm.xlu0 %721, %v711
        %v723 = vpop.permute.xlu0 %722
        %v724 = vlaneseq
        %v725 = vshrl.u32 %v724, 7
        %v726 = vadd.s32 %v725, 16
        %727 = vset.pattern.permute.xlu0 %v726
        %728 = vperm.xlu0 %727, %v711
        %v729 = vpop.permute.xlu0 %728
        %v730 = vlaneseq
        %v731 = vshrl.u32 %v730, 7
        %v732 = vadd.s32 %v731, 24
        %733 = vset.pattern.permute.xlu0 %v732
        %734 = vperm.xlu0 %733, %v711
        %v735 = vpop.permute.xlu0 %734
        %v736 = vperm.slane %v616, 0
        %v737 = vlaneseq
        %v738 = vshrl.u32 %v737, 7
        %740 = vset.pattern.permute.xlu0 %v738
        %741 = vperm.xlu0 %740, %v736
        %v742 = vpop.permute.xlu0 %741
        %v743 = vlaneseq
        %v744 = vshrl.u32 %v743, 7
        %v745 = vadd.s32 %v744, 8
        %746 = vset.pattern.permute.xlu0 %v745
        %747 = vperm.xlu0 %746, %v736
        %v748 = vpop.permute.xlu0 %747
        %v749 = vlaneseq
        %v750 = vshrl.u32 %v749, 7
        %v751 = vadd.s32 %v750, 16
        %752 = vset.pattern.permute.xlu0 %v751
        %753 = vperm.xlu0 %752, %v736
        %v754 = vpop.permute.xlu0 %753
        %v755 = vlaneseq
        %v756 = vshrl.u32 %v755, 7
        %v757 = vadd.s32 %v756, 24
        %758 = vset.pattern.permute.xlu0 %v757
        %759 = vperm.xlu0 %758, %v736
        %v760 = vpop.permute.xlu0 %759
        %v761 = vperm.slane %v617, 0
        %v762 = vlaneseq
        %v763 = vshrl.u32 %v762, 7
        %765 = vset.pattern.permute.xlu0 %v763
        %766 = vperm.xlu0 %765, %v761
        %v767 = vpop.permute.xlu0 %766
        %v768 = vlaneseq
        %v769 = vshrl.u32 %v768, 7
        %v770 = vadd.s32 %v769, 8
        %771 = vset.pattern.permute.xlu0 %v770
        %772 = vperm.xlu0 %771, %v761
        %v773 = vpop.permute.xlu0 %772
        %v774 = vlaneseq
        %v775 = vshrl.u32 %v774, 7
        %v776 = vadd.s32 %v775, 16
        %777 = vset.pattern.permute.xlu0 %v776
        %778 = vperm.xlu0 %777, %v761
        %v779 = vpop.permute.xlu0 %778
        %v780 = vlaneseq
        %v781 = vshrl.u32 %v780, 7
        %v782 = vadd.s32 %v781, 24
        %783 = vset.pattern.permute.xlu0 %v782
        %784 = vperm.xlu0 %783, %v761
        %v785 = vpop.permute.xlu0 %784
        %v786 = vperm.slane %v618, 0
        %v787 = vlaneseq
        %v788 = vshrl.u32 %v787, 7
        %790 = vset.pattern.permute.xlu0 %v788
        %791 = vperm.xlu0 %790, %v786
        %v792 = vpop.permute.xlu0 %791
        %v793 = vlaneseq
        %v794 = vshrl.u32 %v793, 7
        %v795 = vadd.s32 %v794, 8
        %796 = vset.pattern.permute.xlu0 %v795
        %797 = vperm.xlu0 %796, %v786
        %v798 = vpop.permute.xlu0 %797
        %v799 = vlaneseq
        %v800 = vshrl.u32 %v799, 7
        %v801 = vadd.s32 %v800, 16
        %802 = vset.pattern.permute.xlu0 %v801
        %803 = vperm.xlu0 %802, %v786
        %v804 = vpop.permute.xlu0 %803
        %v805 = vlaneseq
        %v806 = vshrl.u32 %v805, 7
        %v807 = vadd.s32 %v806, 24
        %808 = vset.pattern.permute.xlu0 %v807
        %809 = vperm.xlu0 %808, %v786
        %v810 = vpop.permute.xlu0 %809
        %v811 = vperm.slane %v619, 0
        %v812 = vlaneseq
        %v813 = vshrl.u32 %v812, 7
        %815 = vset.pattern.permute.xlu0 %v813
        %816 = vperm.xlu0 %815, %v811
        %v817 = vpop.permute.xlu0 %816
        %v818 = vlaneseq
        %v819 = vshrl.u32 %v818, 7
        %v820 = vadd.s32 %v819, 8
        %821 = vset.pattern.permute.xlu0 %v820
        %822 = vperm.xlu0 %821, %v811
        %v823 = vpop.permute.xlu0 %822
        %v824 = vlaneseq
        %v825 = vshrl.u32 %v824, 7
        %v826 = vadd.s32 %v825, 16
        %827 = vset.pattern.permute.xlu0 %v826
        %828 = vperm.xlu0 %827, %v811
        %v829 = vpop.permute.xlu0 %828
        %v830 = vlaneseq
        %v831 = vshrl.u32 %v830, 7
        %v832 = vadd.s32 %v831, 24
        %833 = vset.pattern.permute.xlu0 %v832
        %834 = vperm.xlu0 %833, %v811
        %v835 = vpop.permute.xlu0 %834
        %v868 = vmul.f32 %v620, %v642
        %v869 = vmul.f32 %v620, %v648
        %v870 = vmul.f32 %v620, %v654
        %v871 = vmul.f32 %v620, %v660
        %v872 = vmul.f32 %v621, %v667
        %v873 = vmul.f32 %v621, %v673
        %v874 = vmul.f32 %v621, %v679
        %v875 = vmul.f32 %v621, %v685
        %v876 = vmul.f32 %v622, %v692
        %v877 = vmul.f32 %v622, %v698
        %v878 = vmul.f32 %v622, %v704
        %v879 = vmul.f32 %v622, %v710
        %v880 = vmul.f32 %v623, %v717
        %v881 = vmul.f32 %v623, %v723
        %v882 = vmul.f32 %v623, %v729
        %v883 = vmul.f32 %v623, %v735
        %v884 = vmul.f32 %v624, %v742
        %v885 = vmul.f32 %v624, %v748
        %v886 = vmul.f32 %v624, %v754
        %v887 = vmul.f32 %v624, %v760
        %v888 = vmul.f32 %v625, %v767
        %v889 = vmul.f32 %v625, %v773
        %v890 = vmul.f32 %v625, %v779
        %v891 = vmul.f32 %v625, %v785
        %v892 = vmul.f32 %v626, %v792
        %v893 = vmul.f32 %v626, %v798
        %v894 = vmul.f32 %v626, %v804
        %v895 = vmul.f32 %v626, %v810
        %v896 = vmul.f32 %v627, %v817
        %v897 = vmul.f32 %v627, %v823
        %v898 = vmul.f32 %v627, %v829
        %v899 = vmul.f32 %v627, %v835
        %v900 = vld [vmem:[%s192 + $0x1] sm:$0x1]
        %v901 = vld [vmem:[%s192 + $0x9] sm:$0x1]
        %v902 = vld [vmem:[%s192 + $0x11] sm:$0x1]
        %v903 = vld [vmem:[%s192 + $0x19] sm:$0x1]
        %v904 = vld [vmem:[%s192 + $0x21] sm:$0x1]
        %v905 = vld [vmem:[%s192 + $0x29] sm:$0x1]
        %v906 = vld [vmem:[%s192 + $0x31] sm:$0x1]
        %v907 = vld [vmem:[%s192 + $0x39] sm:$0x1]
        %v908 = vperm.slane %v506, 1
        %v909 = vperm.slane %v521, 1
        %v910 = vperm.slane %v536, 1
        %v911 = vperm.slane %v551, 1
        %v912 = vperm.slane %v566, 1
        %v913 = vperm.slane %v581, 1
        %v914 = vperm.slane %v596, 1
        %v915 = vperm.slane %v611, 1
        %v924 = vperm.slane %v900, 0
        %v925 = vlaneseq
        %v926 = vshrl.u32 %v925, 7
        %928 = vset.pattern.permute.xlu0 %v926
        %929 = vperm.xlu0 %928, %v924
        %v930 = vpop.permute.xlu0 %929
        %v931 = vlaneseq
        %v932 = vshrl.u32 %v931, 7
        %v933 = vadd.s32 %v932, 8
        %934 = vset.pattern.permute.xlu0 %v933
        %935 = vperm.xlu0 %934, %v924
        %v936 = vpop.permute.xlu0 %935
        %v937 = vlaneseq
        %v938 = vshrl.u32 %v937, 7
        %v939 = vadd.s32 %v938, 16
        %940 = vset.pattern.permute.xlu0 %v939
        %941 = vperm.xlu0 %940, %v924
        %v942 = vpop.permute.xlu0 %941
        %v943 = vlaneseq
        %v944 = vshrl.u32 %v943, 7
        %v945 = vadd.s32 %v944, 24
        %946 = vset.pattern.permute.xlu0 %v945
        %947 = vperm.xlu0 %946, %v924
        %v948 = vpop.permute.xlu0 %947
        %v949 = vperm.slane %v901, 0
        %v950 = vlaneseq
        %v951 = vshrl.u32 %v950, 7
        %953 = vset.pattern.permute.xlu0 %v951
        %954 = vperm.xlu0 %953, %v949
        %v955 = vpop.permute.xlu0 %954
        %v956 = vlaneseq
        %v957 = vshrl.u32 %v956, 7
        %v958 = vadd.s32 %v957, 8
        %959 = vset.pattern.permute.xlu0 %v958
        %960 = vperm.xlu0 %959, %v949
        %v961 = vpop.permute.xlu0 %960
        %v962 = vlaneseq
        %v963 = vshrl.u32 %v962, 7
        %v964 = vadd.s32 %v963, 16
        %965 = vset.pattern.permute.xlu0 %v964
        %966 = vperm.xlu0 %965, %v949
        %v967 = vpop.permute.xlu0 %966
        %v968 = vlaneseq
        %v969 = vshrl.u32 %v968, 7
        %v970 = vadd.s32 %v969, 24
        %971 = vset.pattern.permute.xlu0 %v970
        %972 = vperm.xlu0 %971, %v949
        %v973 = vpop.permute.xlu0 %972
        %v974 = vperm.slane %v902, 0
        %v975 = vlaneseq
        %v976 = vshrl.u32 %v975, 7
        %978 = vset.pattern.permute.xlu0 %v976
        %979 = vperm.xlu0 %978, %v974
        %v980 = vpop.permute.xlu0 %979
        %v981 = vlaneseq
        %v982 = vshrl.u32 %v981, 7
        %v983 = vadd.s32 %v982, 8
        %984 = vset.pattern.permute.xlu0 %v983
        %985 = vperm.xlu0 %984, %v974
        %v986 = vpop.permute.xlu0 %985
        %v987 = vlaneseq
        %v988 = vshrl.u32 %v987, 7
        %v989 = vadd.s32 %v988, 16
        %990 = vset.pattern.permute.xlu0 %v989
        %991 = vperm.xlu0 %990, %v974
        %v992 = vpop.permute.xlu0 %991
        %v993 = vlaneseq
        %v994 = vshrl.u32 %v993, 7
        %v995 = vadd.s32 %v994, 24
        %996 = vset.pattern.permute.xlu0 %v995
        %997 = vperm.xlu0 %996, %v974
        %v998 = vpop.permute.xlu0 %997
        %v999 = vperm.slane %v903, 0
        %v1000 = vlaneseq
        %v1001 = vshrl.u32 %v1000, 7
        %1003 = vset.pattern.permute.xlu0 %v1001
        %1004 = vperm.xlu0 %1003, %v999
        %v1005 = vpop.permute.xlu0 %1004
        %v1006 = vlaneseq
        %v1007 = vshrl.u32 %v1006, 7
        %v1008 = vadd.s32 %v1007, 8
        %1009 = vset.pattern.permute.xlu0 %v1008
        %1010 = vperm.xlu0 %1009, %v999
        %v1011 = vpop.permute.xlu0 %1010
        %v1012 = vlaneseq
        %v1013 = vshrl.u32 %v1012, 7
        %v1014 = vadd.s32 %v1013, 16
        %1015 = vset.pattern.permute.xlu0 %v1014
        %1016 = vperm.xlu0 %1015, %v999
        %v1017 = vpop.permute.xlu0 %1016
        %v1018 = vlaneseq
        %v1019 = vshrl.u32 %v1018, 7
        %v1020 = vadd.s32 %v1019, 24
        %1021 = vset.pattern.permute.xlu0 %v1020
        %1022 = vperm.xlu0 %1021, %v999
        %v1023 = vpop.permute.xlu0 %1022
        %v1024 = vperm.slane %v904, 0
        %v1025 = vlaneseq
        %v1026 = vshrl.u32 %v1025, 7
        %1028 = vset.pattern.permute.xlu0 %v1026
        %1029 = vperm.xlu0 %1028, %v1024
        %v1030 = vpop.permute.xlu0 %1029
        %v1031 = vlaneseq
        %v1032 = vshrl.u32 %v1031, 7
        %v1033 = vadd.s32 %v1032, 8
        %1034 = vset.pattern.permute.xlu0 %v1033
        %1035 = vperm.xlu0 %1034, %v1024
        %v1036 = vpop.permute.xlu0 %1035
        %v1037 = vlaneseq
        %v1038 = vshrl.u32 %v1037, 7
        %v1039 = vadd.s32 %v1038, 16
        %1040 = vset.pattern.permute.xlu0 %v1039
        %1041 = vperm.xlu0 %1040, %v1024
        %v1042 = vpop.permute.xlu0 %1041
        %v1043 = vlaneseq
        %v1044 = vshrl.u32 %v1043, 7
        %v1045 = vadd.s32 %v1044, 24
        %1046 = vset.pattern.permute.xlu0 %v1045
        %1047 = vperm.xlu0 %1046, %v1024
        %v1048 = vpop.permute.xlu0 %1047
        %v1049 = vperm.slane %v905, 0
        %v1050 = vlaneseq
        %v1051 = vshrl.u32 %v1050, 7
        %1053 = vset.pattern.permute.xlu0 %v1051
        %1054 = vperm.xlu0 %1053, %v1049
        %v1055 = vpop.permute.xlu0 %1054
        %v1056 = vlaneseq
        %v1057 = vshrl.u32 %v1056, 7
        %v1058 = vadd.s32 %v1057, 8
        %1059 = vset.pattern.permute.xlu0 %v1058
        %1060 = vperm.xlu0 %1059, %v1049
        %v1061 = vpop.permute.xlu0 %1060
        %v1062 = vlaneseq
        %v1063 = vshrl.u32 %v1062, 7
        %v1064 = vadd.s32 %v1063, 16
        %1065 = vset.pattern.permute.xlu0 %v1064
        %1066 = vperm.xlu0 %1065, %v1049
        %v1067 = vpop.permute.xlu0 %1066
        %v1068 = vlaneseq
        %v1069 = vshrl.u32 %v1068, 7
        %v1070 = vadd.s32 %v1069, 24
        %1071 = vset.pattern.permute.xlu0 %v1070
        %1072 = vperm.xlu0 %1071, %v1049
        %v1073 = vpop.permute.xlu0 %1072
        %v1074 = vperm.slane %v906, 0
        %v1075 = vlaneseq
        %v1076 = vshrl.u32 %v1075, 7
        %1078 = vset.pattern.permute.xlu0 %v1076
        %1079 = vperm.xlu0 %1078, %v1074
        %v1080 = vpop.permute.xlu0 %1079
        %v1081 = vlaneseq
        %v1082 = vshrl.u32 %v1081, 7
        %v1083 = vadd.s32 %v1082, 8
        %1084 = vset.pattern.permute.xlu0 %v1083
        %1085 = vperm.xlu0 %1084, %v1074
        %v1086 = vpop.permute.xlu0 %1085
        %v1087 = vlaneseq
        %v1088 = vshrl.u32 %v1087, 7
        %v1089 = vadd.s32 %v1088, 16
        %1090 = vset.pattern.permute.xlu0 %v1089
        %1091 = vperm.xlu0 %1090, %v1074
        %v1092 = vpop.permute.xlu0 %1091
        %v1093 = vlaneseq
        %v1094 = vshrl.u32 %v1093, 7
        %v1095 = vadd.s32 %v1094, 24
        %1096 = vset.pattern.permute.xlu0 %v1095
        %1097 = vperm.xlu0 %1096, %v1074
        %v1098 = vpop.permute.xlu0 %1097
        %v1099 = vperm.slane %v907, 0
        %v1100 = vlaneseq
        %v1101 = vshrl.u32 %v1100, 7
        %1103 = vset.pattern.permute.xlu0 %v1101
        %1104 = vperm.xlu0 %1103, %v1099
        %v1105 = vpop.permute.xlu0 %1104
        %v1106 = vlaneseq
        %v1107 = vshrl.u32 %v1106, 7
        %v1108 = vadd.s32 %v1107, 8
        %1109 = vset.pattern.permute.xlu0 %v1108
        %1110 = vperm.xlu0 %1109, %v1099
        %v1111 = vpop.permute.xlu0 %1110
        %v1112 = vlaneseq
        %v1113 = vshrl.u32 %v1112, 7
        %v1114 = vadd.s32 %v1113, 16
        %1115 = vset.pattern.permute.xlu0 %v1114
        %1116 = vperm.xlu0 %1115, %v1099
        %v1117 = vpop.permute.xlu0 %1116
        %v1118 = vlaneseq
        %v1119 = vshrl.u32 %v1118, 7
        %v1120 = vadd.s32 %v1119, 24
        %1121 = vset.pattern.permute.xlu0 %v1120
        %1122 = vperm.xlu0 %1121, %v1099
        %v1123 = vpop.permute.xlu0 %1122
        %v1156 = vmul.f32 %v908, %v930
        %v1157 = vmul.f32 %v908, %v936
        %v1158 = vmul.f32 %v908, %v942
        %v1159 = vmul.f32 %v908, %v948
        %v1160 = vmul.f32 %v909, %v955
        %v1161 = vmul.f32 %v909, %v961
        %v1162 = vmul.f32 %v909, %v967
        %v1163 = vmul.f32 %v909, %v973
        %v1164 = vmul.f32 %v910, %v980
        %v1165 = vmul.f32 %v910, %v986
        %v1166 = vmul.f32 %v910, %v992
        %v1167 = vmul.f32 %v910, %v998
        %v1168 = vmul.f32 %v911, %v1005
        %v1169 = vmul.f32 %v911, %v1011
        %v1170 = vmul.f32 %v911, %v1017
        %v1171 = vmul.f32 %v911, %v1023
        %v1172 = vmul.f32 %v912, %v1030
        %v1173 = vmul.f32 %v912, %v1036
        %v1174 = vmul.f32 %v912, %v1042
        %v1175 = vmul.f32 %v912, %v1048
        %v1176 = vmul.f32 %v913, %v1055
        %v1177 = vmul.f32 %v913, %v1061
        %v1178 = vmul.f32 %v913, %v1067
        %v1179 = vmul.f32 %v913, %v1073
        %v1180 = vmul.f32 %v914, %v1080
        %v1181 = vmul.f32 %v914, %v1086
        %v1182 = vmul.f32 %v914, %v1092
        %v1183 = vmul.f32 %v914, %v1098
        %v1184 = vmul.f32 %v915, %v1105
        %v1185 = vmul.f32 %v915, %v1111
        %v1186 = vmul.f32 %v915, %v1117
        %v1187 = vmul.f32 %v915, %v1123
        %v1188 = vadd.f32 %v868, %v1156
        %v1189 = vadd.f32 %v869, %v1157
        %v1190 = vadd.f32 %v870, %v1158
        %v1191 = vadd.f32 %v871, %v1159
        %v1192 = vadd.f32 %v872, %v1160
        %v1193 = vadd.f32 %v873, %v1161
        %v1194 = vadd.f32 %v874, %v1162
        %v1195 = vadd.f32 %v875, %v1163
        %v1196 = vadd.f32 %v876, %v1164
        %v1197 = vadd.f32 %v877, %v1165
        %v1198 = vadd.f32 %v878, %v1166
        %v1199 = vadd.f32 %v879, %v1167
        %v1200 = vadd.f32 %v880, %v1168
        %v1201 = vadd.f32 %v881, %v1169
        %v1202 = vadd.f32 %v882, %v1170
        %v1203 = vadd.f32 %v883, %v1171
        %v1204 = vadd.f32 %v884, %v1172
        %v1205 = vadd.f32 %v885, %v1173
        %v1206 = vadd.f32 %v886, %v1174
        %v1207 = vadd.f32 %v887, %v1175
        %v1208 = vadd.f32 %v888, %v1176
        %v1209 = vadd.f32 %v889, %v1177
        %v1210 = vadd.f32 %v890, %v1178
        %v1211 = vadd.f32 %v891, %v1179
        %v1212 = vadd.f32 %v892, %v1180
        %v1213 = vadd.f32 %v893, %v1181
        %v1214 = vadd.f32 %v894, %v1182
        %v1215 = vadd.f32 %v895, %v1183
        %v1216 = vadd.f32 %v896, %v1184
        %v1217 = vadd.f32 %v897, %v1185
        %v1218 = vadd.f32 %v898, %v1186
        %v1219 = vadd.f32 %v899, %v1187
        %v1220 = vld [vmem:[%s192 + $0x2] sm:$0x1]
        %v1221 = vld [vmem:[%s192 + $0xa] sm:$0x1]
        %v1222 = vld [vmem:[%s192 + $0x12] sm:$0x1]
        %v1223 = vld [vmem:[%s192 + $0x1a] sm:$0x1]
        %v1224 = vld [vmem:[%s192 + $0x22] sm:$0x1]
        %v1225 = vld [vmem:[%s192 + $0x2a] sm:$0x1]
        %v1226 = vld [vmem:[%s192 + $0x32] sm:$0x1]
        %v1227 = vld [vmem:[%s192 + $0x3a] sm:$0x1]
        %v1228 = vperm.slane %v506, 2
        %v1229 = vperm.slane %v521, 2
        %v1230 = vperm.slane %v536, 2
        %v1231 = vperm.slane %v551, 2
        %v1232 = vperm.slane %v566, 2
        %v1233 = vperm.slane %v581, 2
        %v1234 = vperm.slane %v596, 2
        %v1235 = vperm.slane %v611, 2
        %v1244 = vperm.slane %v1220, 0
        %v1245 = vlaneseq
        %v1246 = vshrl.u32 %v1245, 7
        %1248 = vset.pattern.permute.xlu0 %v1246
        %1249 = vperm.xlu0 %1248, %v1244
        %v1250 = vpop.permute.xlu0 %1249
        %v1251 = vlaneseq
        %v1252 = vshrl.u32 %v1251, 7
        %v1253 = vadd.s32 %v1252, 8
        %1254 = vset.pattern.permute.xlu0 %v1253
        %1255 = vperm.xlu0 %1254, %v1244
        %v1256 = vpop.permute.xlu0 %1255
        %v1257 = vlaneseq
        %v1258 = vshrl.u32 %v1257, 7
        %v1259 = vadd.s32 %v1258, 16
        %1260 = vset.pattern.permute.xlu0 %v1259
        %1261 = vperm.xlu0 %1260, %v1244
        %v1262 = vpop.permute.xlu0 %1261
        %v1263 = vlaneseq
        %v1264 = vshrl.u32 %v1263, 7
        %v1265 = vadd.s32 %v1264, 24
        %1266 = vset.pattern.permute.xlu0 %v1265
        %1267 = vperm.xlu0 %1266, %v1244
        %v1268 = vpop.permute.xlu0 %1267
        %v1269 = vperm.slane %v1221, 0
        %v1270 = vlaneseq
        %v1271 = vshrl.u32 %v1270, 7
        %1273 = vset.pattern.permute.xlu0 %v1271
        %1274 = vperm.xlu0 %1273, %v1269
        %v1275 = vpop.permute.xlu0 %1274
        %v1276 = vlaneseq
        %v1277 = vshrl.u32 %v1276, 7
        %v1278 = vadd.s32 %v1277, 8
        %1279 = vset.pattern.permute.xlu0 %v1278
        %1280 = vperm.xlu0 %1279, %v1269
        %v1281 = vpop.permute.xlu0 %1280
        %v1282 = vlaneseq
        %v1283 = vshrl.u32 %v1282, 7
        %v1284 = vadd.s32 %v1283, 16
        %1285 = vset.pattern.permute.xlu0 %v1284
        %1286 = vperm.xlu0 %1285, %v1269
        %v1287 = vpop.permute.xlu0 %1286
        %v1288 = vlaneseq
        %v1289 = vshrl.u32 %v1288, 7
        %v1290 = vadd.s32 %v1289, 24
        %1291 = vset.pattern.permute.xlu0 %v1290
        %1292 = vperm.xlu0 %1291, %v1269
        %v1293 = vpop.permute.xlu0 %1292
        %v1294 = vperm.slane %v1222, 0
        %v1295 = vlaneseq
        %v1296 = vshrl.u32 %v1295, 7
        %1298 = vset.pattern.permute.xlu0 %v1296
        %1299 = vperm.xlu0 %1298, %v1294
        %v1300 = vpop.permute.xlu0 %1299
        %v1301 = vlaneseq
        %v1302 = vshrl.u32 %v1301, 7
        %v1303 = vadd.s32 %v1302, 8
        %1304 = vset.pattern.permute.xlu0 %v1303
        %1305 = vperm.xlu0 %1304, %v1294
        %v1306 = vpop.permute.xlu0 %1305
        %v1307 = vlaneseq
        %v1308 = vshrl.u32 %v1307, 7
        %v1309 = vadd.s32 %v1308, 16
        %1310 = vset.pattern.permute.xlu0 %v1309
        %1311 = vperm.xlu0 %1310, %v1294
        %v1312 = vpop.permute.xlu0 %1311
        %v1313 = vlaneseq
        %v1314 = vshrl.u32 %v1313, 7
        %v1315 = vadd.s32 %v1314, 24
        %1316 = vset.pattern.permute.xlu0 %v1315
        %1317 = vperm.xlu0 %1316, %v1294
        %v1318 = vpop.permute.xlu0 %1317
        %v1319 = vperm.slane %v1223, 0
        %v1320 = vlaneseq
        %v1321 = vshrl.u32 %v1320, 7
        %1323 = vset.pattern.permute.xlu0 %v1321
        %1324 = vperm.xlu0 %1323, %v1319
        %v1325 = vpop.permute.xlu0 %1324
        %v1326 = vlaneseq
        %v1327 = vshrl.u32 %v1326, 7
        %v1328 = vadd.s32 %v1327, 8
        %1329 = vset.pattern.permute.xlu0 %v1328
        %1330 = vperm.xlu0 %1329, %v1319
        %v1331 = vpop.permute.xlu0 %1330
        %v1332 = vlaneseq
        %v1333 = vshrl.u32 %v1332, 7
        %v1334 = vadd.s32 %v1333, 16
        %1335 = vset.pattern.permute.xlu0 %v1334
        %1336 = vperm.xlu0 %1335, %v1319
        %v1337 = vpop.permute.xlu0 %1336
        %v1338 = vlaneseq
        %v1339 = vshrl.u32 %v1338, 7
        %v1340 = vadd.s32 %v1339, 24
        %1341 = vset.pattern.permute.xlu0 %v1340
        %1342 = vperm.xlu0 %1341, %v1319
        %v1343 = vpop.permute.xlu0 %1342
        %v1344 = vperm.slane %v1224, 0
        %v1345 = vlaneseq
        %v1346 = vshrl.u32 %v1345, 7
        %1348 = vset.pattern.permute.xlu0 %v1346
        %1349 = vperm.xlu0 %1348, %v1344
        %v1350 = vpop.permute.xlu0 %1349
        %v1351 = vlaneseq
        %v1352 = vshrl.u32 %v1351, 7
        %v1353 = vadd.s32 %v1352, 8
        %1354 = vset.pattern.permute.xlu0 %v1353
        %1355 = vperm.xlu0 %1354, %v1344
        %v1356 = vpop.permute.xlu0 %1355
        %v1357 = vlaneseq
        %v1358 = vshrl.u32 %v1357, 7
        %v1359 = vadd.s32 %v1358, 16
        %1360 = vset.pattern.permute.xlu0 %v1359
        %1361 = vperm.xlu0 %1360, %v1344
        %v1362 = vpop.permute.xlu0 %1361
        %v1363 = vlaneseq
        %v1364 = vshrl.u32 %v1363, 7
        %v1365 = vadd.s32 %v1364, 24
        %1366 = vset.pattern.permute.xlu0 %v1365
        %1367 = vperm.xlu0 %1366, %v1344
        %v1368 = vpop.permute.xlu0 %1367
        %v1369 = vperm.slane %v1225, 0
        %v1370 = vlaneseq
        %v1371 = vshrl.u32 %v1370, 7
        %1373 = vset.pattern.permute.xlu0 %v1371
        %1374 = vperm.xlu0 %1373, %v1369
        %v1375 = vpop.permute.xlu0 %1374
        %v1376 = vlaneseq
        %v1377 = vshrl.u32 %v1376, 7
        %v1378 = vadd.s32 %v1377, 8
        %1379 = vset.pattern.permute.xlu0 %v1378
        %1380 = vperm.xlu0 %1379, %v1369
        %v1381 = vpop.permute.xlu0 %1380
        %v1382 = vlaneseq
        %v1383 = vshrl.u32 %v1382, 7
        %v1384 = vadd.s32 %v1383, 16
        %1385 = vset.pattern.permute.xlu0 %v1384
        %1386 = vperm.xlu0 %1385, %v1369
        %v1387 = vpop.permute.xlu0 %1386
        %v1388 = vlaneseq
        %v1389 = vshrl.u32 %v1388, 7
        %v1390 = vadd.s32 %v1389, 24
        %1391 = vset.pattern.permute.xlu0 %v1390
        %1392 = vperm.xlu0 %1391, %v1369
        %v1393 = vpop.permute.xlu0 %1392
        %v1394 = vperm.slane %v1226, 0
        %v1395 = vlaneseq
        %v1396 = vshrl.u32 %v1395, 7
        %1398 = vset.pattern.permute.xlu0 %v1396
        %1399 = vperm.xlu0 %1398, %v1394
        %v1400 = vpop.permute.xlu0 %1399
        %v1401 = vlaneseq
        %v1402 = vshrl.u32 %v1401, 7
        %v1403 = vadd.s32 %v1402, 8
        %1404 = vset.pattern.permute.xlu0 %v1403
        %1405 = vperm.xlu0 %1404, %v1394
        %v1406 = vpop.permute.xlu0 %1405
        %v1407 = vlaneseq
        %v1408 = vshrl.u32 %v1407, 7
        %v1409 = vadd.s32 %v1408, 16
        %1410 = vset.pattern.permute.xlu0 %v1409
        %1411 = vperm.xlu0 %1410, %v1394
        %v1412 = vpop.permute.xlu0 %1411
        %v1413 = vlaneseq
        %v1414 = vshrl.u32 %v1413, 7
        %v1415 = vadd.s32 %v1414, 24
        %1416 = vset.pattern.permute.xlu0 %v1415
        %1417 = vperm.xlu0 %1416, %v1394
        %v1418 = vpop.permute.xlu0 %1417
        %v1419 = vperm.slane %v1227, 0
        %v1420 = vlaneseq
        %v1421 = vshrl.u32 %v1420, 7
        %1423 = vset.pattern.permute.xlu0 %v1421
        %1424 = vperm.xlu0 %1423, %v1419
        %v1425 = vpop.permute.xlu0 %1424
        %v1426 = vlaneseq
        %v1427 = vshrl.u32 %v1426, 7
        %v1428 = vadd.s32 %v1427, 8
        %1429 = vset.pattern.permute.xlu0 %v1428
        %1430 = vperm.xlu0 %1429, %v1419
        %v1431 = vpop.permute.xlu0 %1430
        %v1432 = vlaneseq
        %v1433 = vshrl.u32 %v1432, 7
        %v1434 = vadd.s32 %v1433, 16
        %1435 = vset.pattern.permute.xlu0 %v1434
        %1436 = vperm.xlu0 %1435, %v1419
        %v1437 = vpop.permute.xlu0 %1436
        %v1438 = vlaneseq
        %v1439 = vshrl.u32 %v1438, 7
        %v1440 = vadd.s32 %v1439, 24
        %1441 = vset.pattern.permute.xlu0 %v1440
        %1442 = vperm.xlu0 %1441, %v1419
        %v1443 = vpop.permute.xlu0 %1442
        %v1476 = vmul.f32 %v1228, %v1250
        %v1477 = vmul.f32 %v1228, %v1256
        %v1478 = vmul.f32 %v1228, %v1262
        %v1479 = vmul.f32 %v1228, %v1268
        %v1480 = vmul.f32 %v1229, %v1275
        %v1481 = vmul.f32 %v1229, %v1281
        %v1482 = vmul.f32 %v1229, %v1287
        %v1483 = vmul.f32 %v1229, %v1293
        %v1484 = vmul.f32 %v1230, %v1300
        %v1485 = vmul.f32 %v1230, %v1306
        %v1486 = vmul.f32 %v1230, %v1312
        %v1487 = vmul.f32 %v1230, %v1318
        %v1488 = vmul.f32 %v1231, %v1325
        %v1489 = vmul.f32 %v1231, %v1331
        %v1490 = vmul.f32 %v1231, %v1337
        %v1491 = vmul.f32 %v1231, %v1343
        %v1492 = vmul.f32 %v1232, %v1350
        %v1493 = vmul.f32 %v1232, %v1356
        %v1494 = vmul.f32 %v1232, %v1362
        %v1495 = vmul.f32 %v1232, %v1368
        %v1496 = vmul.f32 %v1233, %v1375
        %v1497 = vmul.f32 %v1233, %v1381
        %v1498 = vmul.f32 %v1233, %v1387
        %v1499 = vmul.f32 %v1233, %v1393
        %v1500 = vmul.f32 %v1234, %v1400
        %v1501 = vmul.f32 %v1234, %v1406
        %v1502 = vmul.f32 %v1234, %v1412
        %v1503 = vmul.f32 %v1234, %v1418
        %v1504 = vmul.f32 %v1235, %v1425
        %v1505 = vmul.f32 %v1235, %v1431
        %v1506 = vmul.f32 %v1235, %v1437
        %v1507 = vmul.f32 %v1235, %v1443
        %v1508 = vadd.f32 %v1188, %v1476
        %v1509 = vadd.f32 %v1189, %v1477
        %v1510 = vadd.f32 %v1190, %v1478
        %v1511 = vadd.f32 %v1191, %v1479
        %v1512 = vadd.f32 %v1192, %v1480
        %v1513 = vadd.f32 %v1193, %v1481
        %v1514 = vadd.f32 %v1194, %v1482
        %v1515 = vadd.f32 %v1195, %v1483
        %v1516 = vadd.f32 %v1196, %v1484
        %v1517 = vadd.f32 %v1197, %v1485
        %v1518 = vadd.f32 %v1198, %v1486
        %v1519 = vadd.f32 %v1199, %v1487
        %v1520 = vadd.f32 %v1200, %v1488
        %v1521 = vadd.f32 %v1201, %v1489
        %v1522 = vadd.f32 %v1202, %v1490
        %v1523 = vadd.f32 %v1203, %v1491
        %v1524 = vadd.f32 %v1204, %v1492
        %v1525 = vadd.f32 %v1205, %v1493
        %v1526 = vadd.f32 %v1206, %v1494
        %v1527 = vadd.f32 %v1207, %v1495
        %v1528 = vadd.f32 %v1208, %v1496
        %v1529 = vadd.f32 %v1209, %v1497
        %v1530 = vadd.f32 %v1210, %v1498
        %v1531 = vadd.f32 %v1211, %v1499
        %v1532 = vadd.f32 %v1212, %v1500
        %v1533 = vadd.f32 %v1213, %v1501
        %v1534 = vadd.f32 %v1214, %v1502
        %v1535 = vadd.f32 %v1215, %v1503
        %v1536 = vadd.f32 %v1216, %v1504
        %v1537 = vadd.f32 %v1217, %v1505
        %v1538 = vadd.f32 %v1218, %v1506
        %v1539 = vadd.f32 %v1219, %v1507
        %v1540 = vld [vmem:[%s192 + $0x3] sm:$0x1]
        %v1541 = vld [vmem:[%s192 + $0xb] sm:$0x1]
        %v1542 = vld [vmem:[%s192 + $0x13] sm:$0x1]
        %v1543 = vld [vmem:[%s192 + $0x1b] sm:$0x1]
        %v1544 = vld [vmem:[%s192 + $0x23] sm:$0x1]
        %v1545 = vld [vmem:[%s192 + $0x2b] sm:$0x1]
        %v1546 = vld [vmem:[%s192 + $0x33] sm:$0x1]
        %v1547 = vld [vmem:[%s192 + $0x3b] sm:$0x1]
        %v1548 = vperm.slane %v506, 3
        %v1549 = vperm.slane %v521, 3
        %v1550 = vperm.slane %v536, 3
        %v1551 = vperm.slane %v551, 3
        %v1552 = vperm.slane %v566, 3
        %v1553 = vperm.slane %v581, 3
        %v1554 = vperm.slane %v596, 3
        %v1555 = vperm.slane %v611, 3
        %v1564 = vperm.slane %v1540, 0
        %v1565 = vlaneseq
        %v1566 = vshrl.u32 %v1565, 7
        %1568 = vset.pattern.permute.xlu0 %v1566
        %1569 = vperm.xlu0 %1568, %v1564
        %v1570 = vpop.permute.xlu0 %1569
        %v1571 = vlaneseq
        %v1572 = vshrl.u32 %v1571, 7
        %v1573 = vadd.s32 %v1572, 8
        %1574 = vset.pattern.permute.xlu0 %v1573
        %1575 = vperm.xlu0 %1574, %v1564
        %v1576 = vpop.permute.xlu0 %1575
        %v1577 = vlaneseq
        %v1578 = vshrl.u32 %v1577, 7
        %v1579 = vadd.s32 %v1578, 16
        %1580 = vset.pattern.permute.xlu0 %v1579
        %1581 = vperm.xlu0 %1580, %v1564
        %v1582 = vpop.permute.xlu0 %1581
        %v1583 = vlaneseq
        %v1584 = vshrl.u32 %v1583, 7
        %v1585 = vadd.s32 %v1584, 24
        %1586 = vset.pattern.permute.xlu0 %v1585
        %1587 = vperm.xlu0 %1586, %v1564
        %v1588 = vpop.permute.xlu0 %1587
        %v1589 = vperm.slane %v1541, 0
        %v1590 = vlaneseq
        %v1591 = vshrl.u32 %v1590, 7
        %1593 = vset.pattern.permute.xlu0 %v1591
        %1594 = vperm.xlu0 %1593, %v1589
        %v1595 = vpop.permute.xlu0 %1594
        %v1596 = vlaneseq
        %v1597 = vshrl.u32 %v1596, 7
        %v1598 = vadd.s32 %v1597, 8
        %1599 = vset.pattern.permute.xlu0 %v1598
        %1600 = vperm.xlu0 %1599, %v1589
        %v1601 = vpop.permute.xlu0 %1600
        %v1602 = vlaneseq
        %v1603 = vshrl.u32 %v1602, 7
        %v1604 = vadd.s32 %v1603, 16
        %1605 = vset.pattern.permute.xlu0 %v1604
        %1606 = vperm.xlu0 %1605, %v1589
        %v1607 = vpop.permute.xlu0 %1606
        %v1608 = vlaneseq
        %v1609 = vshrl.u32 %v1608, 7
        %v1610 = vadd.s32 %v1609, 24
        %1611 = vset.pattern.permute.xlu0 %v1610
        %1612 = vperm.xlu0 %1611, %v1589
        %v1613 = vpop.permute.xlu0 %1612
        %v1614 = vperm.slane %v1542, 0
        %v1615 = vlaneseq
        %v1616 = vshrl.u32 %v1615, 7
        %1618 = vset.pattern.permute.xlu0 %v1616
        %1619 = vperm.xlu0 %1618, %v1614
        %v1620 = vpop.permute.xlu0 %1619
        %v1621 = vlaneseq
        %v1622 = vshrl.u32 %v1621, 7
        %v1623 = vadd.s32 %v1622, 8
        %1624 = vset.pattern.permute.xlu0 %v1623
        %1625 = vperm.xlu0 %1624, %v1614
        %v1626 = vpop.permute.xlu0 %1625
        %v1627 = vlaneseq
        %v1628 = vshrl.u32 %v1627, 7
        %v1629 = vadd.s32 %v1628, 16
        %1630 = vset.pattern.permute.xlu0 %v1629
        %1631 = vperm.xlu0 %1630, %v1614
        %v1632 = vpop.permute.xlu0 %1631
        %v1633 = vlaneseq
        %v1634 = vshrl.u32 %v1633, 7
        %v1635 = vadd.s32 %v1634, 24
        %1636 = vset.pattern.permute.xlu0 %v1635
        %1637 = vperm.xlu0 %1636, %v1614
        %v1638 = vpop.permute.xlu0 %1637
        %v1639 = vperm.slane %v1543, 0
        %v1640 = vlaneseq
        %v1641 = vshrl.u32 %v1640, 7
        %1643 = vset.pattern.permute.xlu0 %v1641
        %1644 = vperm.xlu0 %1643, %v1639
        %v1645 = vpop.permute.xlu0 %1644
        %v1646 = vlaneseq
        %v1647 = vshrl.u32 %v1646, 7
        %v1648 = vadd.s32 %v1647, 8
        %1649 = vset.pattern.permute.xlu0 %v1648
        %1650 = vperm.xlu0 %1649, %v1639
        %v1651 = vpop.permute.xlu0 %1650
        %v1652 = vlaneseq
        %v1653 = vshrl.u32 %v1652, 7
        %v1654 = vadd.s32 %v1653, 16
        %1655 = vset.pattern.permute.xlu0 %v1654
        %1656 = vperm.xlu0 %1655, %v1639
        %v1657 = vpop.permute.xlu0 %1656
        %v1658 = vlaneseq
        %v1659 = vshrl.u32 %v1658, 7
        %v1660 = vadd.s32 %v1659, 24
        %1661 = vset.pattern.permute.xlu0 %v1660
        %1662 = vperm.xlu0 %1661, %v1639
        %v1663 = vpop.permute.xlu0 %1662
        %v1664 = vperm.slane %v1544, 0
        %v1665 = vlaneseq
        %v1666 = vshrl.u32 %v1665, 7
        %1668 = vset.pattern.permute.xlu0 %v1666
        %1669 = vperm.xlu0 %1668, %v1664
        %v1670 = vpop.permute.xlu0 %1669
        %v1671 = vlaneseq
        %v1672 = vshrl.u32 %v1671, 7
        %v1673 = vadd.s32 %v1672, 8
        %1674 = vset.pattern.permute.xlu0 %v1673
        %1675 = vperm.xlu0 %1674, %v1664
        %v1676 = vpop.permute.xlu0 %1675
        %v1677 = vlaneseq
        %v1678 = vshrl.u32 %v1677, 7
        %v1679 = vadd.s32 %v1678, 16
        %1680 = vset.pattern.permute.xlu0 %v1679
        %1681 = vperm.xlu0 %1680, %v1664
        %v1682 = vpop.permute.xlu0 %1681
        %v1683 = vlaneseq
        %v1684 = vshrl.u32 %v1683, 7
        %v1685 = vadd.s32 %v1684, 24
        %1686 = vset.pattern.permute.xlu0 %v1685
        %1687 = vperm.xlu0 %1686, %v1664
        %v1688 = vpop.permute.xlu0 %1687
        %v1689 = vperm.slane %v1545, 0
        %v1690 = vlaneseq
        %v1691 = vshrl.u32 %v1690, 7
        %1693 = vset.pattern.permute.xlu0 %v1691
        %1694 = vperm.xlu0 %1693, %v1689
        %v1695 = vpop.permute.xlu0 %1694
        %v1696 = vlaneseq
        %v1697 = vshrl.u32 %v1696, 7
        %v1698 = vadd.s32 %v1697, 8
        %1699 = vset.pattern.permute.xlu0 %v1698
        %1700 = vperm.xlu0 %1699, %v1689
        %v1701 = vpop.permute.xlu0 %1700
        %v1702 = vlaneseq
        %v1703 = vshrl.u32 %v1702, 7
        %v1704 = vadd.s32 %v1703, 16
        %1705 = vset.pattern.permute.xlu0 %v1704
        %1706 = vperm.xlu0 %1705, %v1689
        %v1707 = vpop.permute.xlu0 %1706
        %v1708 = vlaneseq
        %v1709 = vshrl.u32 %v1708, 7
        %v1710 = vadd.s32 %v1709, 24
        %1711 = vset.pattern.permute.xlu0 %v1710
        %1712 = vperm.xlu0 %1711, %v1689
        %v1713 = vpop.permute.xlu0 %1712
        %v1714 = vperm.slane %v1546, 0
        %v1715 = vlaneseq
        %v1716 = vshrl.u32 %v1715, 7
        %1718 = vset.pattern.permute.xlu0 %v1716
        %1719 = vperm.xlu0 %1718, %v1714
        %v1720 = vpop.permute.xlu0 %1719
        %v1721 = vlaneseq
        %v1722 = vshrl.u32 %v1721, 7
        %v1723 = vadd.s32 %v1722, 8
        %1724 = vset.pattern.permute.xlu0 %v1723
        %1725 = vperm.xlu0 %1724, %v1714
        %v1726 = vpop.permute.xlu0 %1725
        %v1727 = vlaneseq
        %v1728 = vshrl.u32 %v1727, 7
        %v1729 = vadd.s32 %v1728, 16
        %1730 = vset.pattern.permute.xlu0 %v1729
        %1731 = vperm.xlu0 %1730, %v1714
        %v1732 = vpop.permute.xlu0 %1731
        %v1733 = vlaneseq
        %v1734 = vshrl.u32 %v1733, 7
        %v1735 = vadd.s32 %v1734, 24
        %1736 = vset.pattern.permute.xlu0 %v1735
        %1737 = vperm.xlu0 %1736, %v1714
        %v1738 = vpop.permute.xlu0 %1737
        %v1739 = vperm.slane %v1547, 0
        %v1740 = vlaneseq
        %v1741 = vshrl.u32 %v1740, 7
        %1743 = vset.pattern.permute.xlu0 %v1741
        %1744 = vperm.xlu0 %1743, %v1739
        %v1745 = vpop.permute.xlu0 %1744
        %v1746 = vlaneseq
        %v1747 = vshrl.u32 %v1746, 7
        %v1748 = vadd.s32 %v1747, 8
        %1749 = vset.pattern.permute.xlu0 %v1748
        %1750 = vperm.xlu0 %1749, %v1739
        %v1751 = vpop.permute.xlu0 %1750
        %v1752 = vlaneseq
        %v1753 = vshrl.u32 %v1752, 7
        %v1754 = vadd.s32 %v1753, 16
        %1755 = vset.pattern.permute.xlu0 %v1754
        %1756 = vperm.xlu0 %1755, %v1739
        %v1757 = vpop.permute.xlu0 %1756
        %v1758 = vlaneseq
        %v1759 = vshrl.u32 %v1758, 7
        %v1760 = vadd.s32 %v1759, 24
        %1761 = vset.pattern.permute.xlu0 %v1760
        %1762 = vperm.xlu0 %1761, %v1739
        %v1763 = vpop.permute.xlu0 %1762
        %v1796 = vmul.f32 %v1548, %v1570
        %v1797 = vmul.f32 %v1548, %v1576
        %v1798 = vmul.f32 %v1548, %v1582
        %v1799 = vmul.f32 %v1548, %v1588
        %v1800 = vmul.f32 %v1549, %v1595
        %v1801 = vmul.f32 %v1549, %v1601
        %v1802 = vmul.f32 %v1549, %v1607
        %v1803 = vmul.f32 %v1549, %v1613
        %v1804 = vmul.f32 %v1550, %v1620
        %v1805 = vmul.f32 %v1550, %v1626
        %v1806 = vmul.f32 %v1550, %v1632
        %v1807 = vmul.f32 %v1550, %v1638
        %v1808 = vmul.f32 %v1551, %v1645
        %v1809 = vmul.f32 %v1551, %v1651
        %v1810 = vmul.f32 %v1551, %v1657
        %v1811 = vmul.f32 %v1551, %v1663
        %v1812 = vmul.f32 %v1552, %v1670
        %v1813 = vmul.f32 %v1552, %v1676
        %v1814 = vmul.f32 %v1552, %v1682
        %v1815 = vmul.f32 %v1552, %v1688
        %v1816 = vmul.f32 %v1553, %v1695
        %v1817 = vmul.f32 %v1553, %v1701
        %v1818 = vmul.f32 %v1553, %v1707
        %v1819 = vmul.f32 %v1553, %v1713
        %v1820 = vmul.f32 %v1554, %v1720
        %v1821 = vmul.f32 %v1554, %v1726
        %v1822 = vmul.f32 %v1554, %v1732
        %v1823 = vmul.f32 %v1554, %v1738
        %v1824 = vmul.f32 %v1555, %v1745
        %v1825 = vmul.f32 %v1555, %v1751
        %v1826 = vmul.f32 %v1555, %v1757
        %v1827 = vmul.f32 %v1555, %v1763
        %v1828 = vadd.f32 %v1508, %v1796
        %v1829 = vadd.f32 %v1509, %v1797
        %v1830 = vadd.f32 %v1510, %v1798
        %v1831 = vadd.f32 %v1511, %v1799
        %v1832 = vadd.f32 %v1512, %v1800
        %v1833 = vadd.f32 %v1513, %v1801
        %v1834 = vadd.f32 %v1514, %v1802
        %v1835 = vadd.f32 %v1515, %v1803
        %v1836 = vadd.f32 %v1516, %v1804
        %v1837 = vadd.f32 %v1517, %v1805
        %v1838 = vadd.f32 %v1518, %v1806
        %v1839 = vadd.f32 %v1519, %v1807
        %v1840 = vadd.f32 %v1520, %v1808
        %v1841 = vadd.f32 %v1521, %v1809
        %v1842 = vadd.f32 %v1522, %v1810
        %v1843 = vadd.f32 %v1523, %v1811
        %v1844 = vadd.f32 %v1524, %v1812
        %v1845 = vadd.f32 %v1525, %v1813
        %v1846 = vadd.f32 %v1526, %v1814
        %v1847 = vadd.f32 %v1527, %v1815
        %v1848 = vadd.f32 %v1528, %v1816
        %v1849 = vadd.f32 %v1529, %v1817
        %v1850 = vadd.f32 %v1530, %v1818
        %v1851 = vadd.f32 %v1531, %v1819
        %v1852 = vadd.f32 %v1532, %v1820
        %v1853 = vadd.f32 %v1533, %v1821
        %v1854 = vadd.f32 %v1534, %v1822
        %v1855 = vadd.f32 %v1535, %v1823
        %v1856 = vadd.f32 %v1536, %v1824
        %v1857 = vadd.f32 %v1537, %v1825
        %v1858 = vadd.f32 %v1538, %v1826
        %v1859 = vadd.f32 %v1539, %v1827
        %v1860 = vld [vmem:[%s192 + $0x4] sm:$0x1]
        %v1861 = vld [vmem:[%s192 + $0xc] sm:$0x1]
        %v1862 = vld [vmem:[%s192 + $0x14] sm:$0x1]
        %v1863 = vld [vmem:[%s192 + $0x1c] sm:$0x1]
        %v1864 = vld [vmem:[%s192 + $0x24] sm:$0x1]
        %v1865 = vld [vmem:[%s192 + $0x2c] sm:$0x1]
        %v1866 = vld [vmem:[%s192 + $0x34] sm:$0x1]
        %v1867 = vld [vmem:[%s192 + $0x3c] sm:$0x1]
        %v1868 = vperm.slane %v506, 4
        %v1869 = vperm.slane %v521, 4
        %v1870 = vperm.slane %v536, 4
        %v1871 = vperm.slane %v551, 4
        %v1872 = vperm.slane %v566, 4
        %v1873 = vperm.slane %v581, 4
        %v1874 = vperm.slane %v596, 4
        %v1875 = vperm.slane %v611, 4
        %v1884 = vperm.slane %v1860, 0
        %v1885 = vlaneseq
        %v1886 = vshrl.u32 %v1885, 7
        %1888 = vset.pattern.permute.xlu0 %v1886
        %1889 = vperm.xlu0 %1888, %v1884
        %v1890 = vpop.permute.xlu0 %1889
        %v1891 = vlaneseq
        %v1892 = vshrl.u32 %v1891, 7
        %v1893 = vadd.s32 %v1892, 8
        %1894 = vset.pattern.permute.xlu0 %v1893
        %1895 = vperm.xlu0 %1894, %v1884
        %v1896 = vpop.permute.xlu0 %1895
        %v1897 = vlaneseq
        %v1898 = vshrl.u32 %v1897, 7
        %v1899 = vadd.s32 %v1898, 16
        %1900 = vset.pattern.permute.xlu0 %v1899
        %1901 = vperm.xlu0 %1900, %v1884
        %v1902 = vpop.permute.xlu0 %1901
        %v1903 = vlaneseq
        %v1904 = vshrl.u32 %v1903, 7
        %v1905 = vadd.s32 %v1904, 24
        %1906 = vset.pattern.permute.xlu0 %v1905
        %1907 = vperm.xlu0 %1906, %v1884
        %v1908 = vpop.permute.xlu0 %1907
        %v1909 = vperm.slane %v1861, 0
        %v1910 = vlaneseq
        %v1911 = vshrl.u32 %v1910, 7
        %1913 = vset.pattern.permute.xlu0 %v1911
        %1914 = vperm.xlu0 %1913, %v1909
        %v1915 = vpop.permute.xlu0 %1914
        %v1916 = vlaneseq
        %v1917 = vshrl.u32 %v1916, 7
        %v1918 = vadd.s32 %v1917, 8
        %1919 = vset.pattern.permute.xlu0 %v1918
        %1920 = vperm.xlu0 %1919, %v1909
        %v1921 = vpop.permute.xlu0 %1920
        %v1922 = vlaneseq
        %v1923 = vshrl.u32 %v1922, 7
        %v1924 = vadd.s32 %v1923, 16
        %1925 = vset.pattern.permute.xlu0 %v1924
        %1926 = vperm.xlu0 %1925, %v1909
        %v1927 = vpop.permute.xlu0 %1926
        %v1928 = vlaneseq
        %v1929 = vshrl.u32 %v1928, 7
        %v1930 = vadd.s32 %v1929, 24
        %1931 = vset.pattern.permute.xlu0 %v1930
        %1932 = vperm.xlu0 %1931, %v1909
        %v1933 = vpop.permute.xlu0 %1932
        %v1934 = vperm.slane %v1862, 0
        %v1935 = vlaneseq
        %v1936 = vshrl.u32 %v1935, 7
        %1938 = vset.pattern.permute.xlu0 %v1936
        %1939 = vperm.xlu0 %1938, %v1934
        %v1940 = vpop.permute.xlu0 %1939
        %v1941 = vlaneseq
        %v1942 = vshrl.u32 %v1941, 7
        %v1943 = vadd.s32 %v1942, 8
        %1944 = vset.pattern.permute.xlu0 %v1943
        %1945 = vperm.xlu0 %1944, %v1934
        %v1946 = vpop.permute.xlu0 %1945
        %v1947 = vlaneseq
        %v1948 = vshrl.u32 %v1947, 7
        %v1949 = vadd.s32 %v1948, 16
        %1950 = vset.pattern.permute.xlu0 %v1949
        %1951 = vperm.xlu0 %1950, %v1934
        %v1952 = vpop.permute.xlu0 %1951
        %v1953 = vlaneseq
        %v1954 = vshrl.u32 %v1953, 7
        %v1955 = vadd.s32 %v1954, 24
        %1956 = vset.pattern.permute.xlu0 %v1955
        %1957 = vperm.xlu0 %1956, %v1934
        %v1958 = vpop.permute.xlu0 %1957
        %v1959 = vperm.slane %v1863, 0
        %v1960 = vlaneseq
        %v1961 = vshrl.u32 %v1960, 7
        %1963 = vset.pattern.permute.xlu0 %v1961
        %1964 = vperm.xlu0 %1963, %v1959
        %v1965 = vpop.permute.xlu0 %1964
        %v1966 = vlaneseq
        %v1967 = vshrl.u32 %v1966, 7
        %v1968 = vadd.s32 %v1967, 8
        %1969 = vset.pattern.permute.xlu0 %v1968
        %1970 = vperm.xlu0 %1969, %v1959
        %v1971 = vpop.permute.xlu0 %1970
        %v1972 = vlaneseq
        %v1973 = vshrl.u32 %v1972, 7
        %v1974 = vadd.s32 %v1973, 16
        %1975 = vset.pattern.permute.xlu0 %v1974
        %1976 = vperm.xlu0 %1975, %v1959
        %v1977 = vpop.permute.xlu0 %1976
        %v1978 = vlaneseq
        %v1979 = vshrl.u32 %v1978, 7
        %v1980 = vadd.s32 %v1979, 24
        %1981 = vset.pattern.permute.xlu0 %v1980
        %1982 = vperm.xlu0 %1981, %v1959
        %v1983 = vpop.permute.xlu0 %1982
        %v1984 = vperm.slane %v1864, 0
        %v1985 = vlaneseq
        %v1986 = vshrl.u32 %v1985, 7
        %1988 = vset.pattern.permute.xlu0 %v1986
        %1989 = vperm.xlu0 %1988, %v1984
        %v1990 = vpop.permute.xlu0 %1989
        %v1991 = vlaneseq
        %v1992 = vshrl.u32 %v1991, 7
        %v1993 = vadd.s32 %v1992, 8
        %1994 = vset.pattern.permute.xlu0 %v1993
        %1995 = vperm.xlu0 %1994, %v1984
        %v1996 = vpop.permute.xlu0 %1995
        %v1997 = vlaneseq
        %v1998 = vshrl.u32 %v1997, 7
        %v1999 = vadd.s32 %v1998, 16
        %2000 = vset.pattern.permute.xlu0 %v1999
        %2001 = vperm.xlu0 %2000, %v1984
        %v2002 = vpop.permute.xlu0 %2001
        %v2003 = vlaneseq
        %v2004 = vshrl.u32 %v2003, 7
        %v2005 = vadd.s32 %v2004, 24
        %2006 = vset.pattern.permute.xlu0 %v2005
        %2007 = vperm.xlu0 %2006, %v1984
        %v2008 = vpop.permute.xlu0 %2007
        %v2009 = vperm.slane %v1865, 0
        %v2010 = vlaneseq
        %v2011 = vshrl.u32 %v2010, 7
        %2013 = vset.pattern.permute.xlu0 %v2011
        %2014 = vperm.xlu0 %2013, %v2009
        %v2015 = vpop.permute.xlu0 %2014
        %v2016 = vlaneseq
        %v2017 = vshrl.u32 %v2016, 7
        %v2018 = vadd.s32 %v2017, 8
        %2019 = vset.pattern.permute.xlu0 %v2018
        %2020 = vperm.xlu0 %2019, %v2009
        %v2021 = vpop.permute.xlu0 %2020
        %v2022 = vlaneseq
        %v2023 = vshrl.u32 %v2022, 7
        %v2024 = vadd.s32 %v2023, 16
        %2025 = vset.pattern.permute.xlu0 %v2024
        %2026 = vperm.xlu0 %2025, %v2009
        %v2027 = vpop.permute.xlu0 %2026
        %v2028 = vlaneseq
        %v2029 = vshrl.u32 %v2028, 7
        %v2030 = vadd.s32 %v2029, 24
        %2031 = vset.pattern.permute.xlu0 %v2030
        %2032 = vperm.xlu0 %2031, %v2009
        %v2033 = vpop.permute.xlu0 %2032
        %v2034 = vperm.slane %v1866, 0
        %v2035 = vlaneseq
        %v2036 = vshrl.u32 %v2035, 7
        %2038 = vset.pattern.permute.xlu0 %v2036
        %2039 = vperm.xlu0 %2038, %v2034
        %v2040 = vpop.permute.xlu0 %2039
        %v2041 = vlaneseq
        %v2042 = vshrl.u32 %v2041, 7
        %v2043 = vadd.s32 %v2042, 8
        %2044 = vset.pattern.permute.xlu0 %v2043
        %2045 = vperm.xlu0 %2044, %v2034
        %v2046 = vpop.permute.xlu0 %2045
        %v2047 = vlaneseq
        %v2048 = vshrl.u32 %v2047, 7
        %v2049 = vadd.s32 %v2048, 16
        %2050 = vset.pattern.permute.xlu0 %v2049
        %2051 = vperm.xlu0 %2050, %v2034
        %v2052 = vpop.permute.xlu0 %2051
        %v2053 = vlaneseq
        %v2054 = vshrl.u32 %v2053, 7
        %v2055 = vadd.s32 %v2054, 24
        %2056 = vset.pattern.permute.xlu0 %v2055
        %2057 = vperm.xlu0 %2056, %v2034
        %v2058 = vpop.permute.xlu0 %2057
        %v2059 = vperm.slane %v1867, 0
        %v2060 = vlaneseq
        %v2061 = vshrl.u32 %v2060, 7
        %2063 = vset.pattern.permute.xlu0 %v2061
        %2064 = vperm.xlu0 %2063, %v2059
        %v2065 = vpop.permute.xlu0 %2064
        %v2066 = vlaneseq
        %v2067 = vshrl.u32 %v2066, 7
        %v2068 = vadd.s32 %v2067, 8
        %2069 = vset.pattern.permute.xlu0 %v2068
        %2070 = vperm.xlu0 %2069, %v2059
        %v2071 = vpop.permute.xlu0 %2070
        %v2072 = vlaneseq
        %v2073 = vshrl.u32 %v2072, 7
        %v2074 = vadd.s32 %v2073, 16
        %2075 = vset.pattern.permute.xlu0 %v2074
        %2076 = vperm.xlu0 %2075, %v2059
        %v2077 = vpop.permute.xlu0 %2076
        %v2078 = vlaneseq
        %v2079 = vshrl.u32 %v2078, 7
        %v2080 = vadd.s32 %v2079, 24
        %2081 = vset.pattern.permute.xlu0 %v2080
        %2082 = vperm.xlu0 %2081, %v2059
        %v2083 = vpop.permute.xlu0 %2082
        %v2116 = vmul.f32 %v1868, %v1890
        %v2117 = vmul.f32 %v1868, %v1896
        %v2118 = vmul.f32 %v1868, %v1902
        %v2119 = vmul.f32 %v1868, %v1908
        %v2120 = vmul.f32 %v1869, %v1915
        %v2121 = vmul.f32 %v1869, %v1921
        %v2122 = vmul.f32 %v1869, %v1927
        %v2123 = vmul.f32 %v1869, %v1933
        %v2124 = vmul.f32 %v1870, %v1940
        %v2125 = vmul.f32 %v1870, %v1946
        %v2126 = vmul.f32 %v1870, %v1952
        %v2127 = vmul.f32 %v1870, %v1958
        %v2128 = vmul.f32 %v1871, %v1965
        %v2129 = vmul.f32 %v1871, %v1971
        %v2130 = vmul.f32 %v1871, %v1977
        %v2131 = vmul.f32 %v1871, %v1983
        %v2132 = vmul.f32 %v1872, %v1990
        %v2133 = vmul.f32 %v1872, %v1996
        %v2134 = vmul.f32 %v1872, %v2002
        %v2135 = vmul.f32 %v1872, %v2008
        %v2136 = vmul.f32 %v1873, %v2015
        %v2137 = vmul.f32 %v1873, %v2021
        %v2138 = vmul.f32 %v1873, %v2027
        %v2139 = vmul.f32 %v1873, %v2033
        %v2140 = vmul.f32 %v1874, %v2040
        %v2141 = vmul.f32 %v1874, %v2046
        %v2142 = vmul.f32 %v1874, %v2052
        %v2143 = vmul.f32 %v1874, %v2058
        %v2144 = vmul.f32 %v1875, %v2065
        %v2145 = vmul.f32 %v1875, %v2071
        %v2146 = vmul.f32 %v1875, %v2077
        %v2147 = vmul.f32 %v1875, %v2083
        %v2148 = vadd.f32 %v1828, %v2116
        %v2149 = vadd.f32 %v1829, %v2117
        %v2150 = vadd.f32 %v1830, %v2118
        %v2151 = vadd.f32 %v1831, %v2119
        %v2152 = vadd.f32 %v1832, %v2120
        %v2153 = vadd.f32 %v1833, %v2121
        %v2154 = vadd.f32 %v1834, %v2122
        %v2155 = vadd.f32 %v1835, %v2123
        %v2156 = vadd.f32 %v1836, %v2124
        %v2157 = vadd.f32 %v1837, %v2125
        %v2158 = vadd.f32 %v1838, %v2126
        %v2159 = vadd.f32 %v1839, %v2127
        %v2160 = vadd.f32 %v1840, %v2128
        %v2161 = vadd.f32 %v1841, %v2129
        %v2162 = vadd.f32 %v1842, %v2130
        %v2163 = vadd.f32 %v1843, %v2131
        %v2164 = vadd.f32 %v1844, %v2132
        %v2165 = vadd.f32 %v1845, %v2133
        %v2166 = vadd.f32 %v1846, %v2134
        %v2167 = vadd.f32 %v1847, %v2135
        %v2168 = vadd.f32 %v1848, %v2136
        %v2169 = vadd.f32 %v1849, %v2137
        %v2170 = vadd.f32 %v1850, %v2138
        %v2171 = vadd.f32 %v1851, %v2139
        %v2172 = vadd.f32 %v1852, %v2140
        %v2173 = vadd.f32 %v1853, %v2141
        %v2174 = vadd.f32 %v1854, %v2142
        %v2175 = vadd.f32 %v1855, %v2143
        %v2176 = vadd.f32 %v1856, %v2144
        %v2177 = vadd.f32 %v1857, %v2145
        %v2178 = vadd.f32 %v1858, %v2146
        %v2179 = vadd.f32 %v1859, %v2147
        %v2180 = vld [vmem:[%s192 + $0x5] sm:$0x1]
        %v2181 = vld [vmem:[%s192 + $0xd] sm:$0x1]
        %v2182 = vld [vmem:[%s192 + $0x15] sm:$0x1]
        %v2183 = vld [vmem:[%s192 + $0x1d] sm:$0x1]
        %v2184 = vld [vmem:[%s192 + $0x25] sm:$0x1]
        %v2185 = vld [vmem:[%s192 + $0x2d] sm:$0x1]
        %v2186 = vld [vmem:[%s192 + $0x35] sm:$0x1]
        %v2187 = vld [vmem:[%s192 + $0x3d] sm:$0x1]
        %v2188 = vperm.slane %v506, 5
        %v2189 = vperm.slane %v521, 5
        %v2190 = vperm.slane %v536, 5
        %v2191 = vperm.slane %v551, 5
        %v2192 = vperm.slane %v566, 5
        %v2193 = vperm.slane %v581, 5
        %v2194 = vperm.slane %v596, 5
        %v2195 = vperm.slane %v611, 5
        %v2204 = vperm.slane %v2180, 0
        %v2205 = vlaneseq
        %v2206 = vshrl.u32 %v2205, 7
        %2208 = vset.pattern.permute.xlu0 %v2206
        %2209 = vperm.xlu0 %2208, %v2204
        %v2210 = vpop.permute.xlu0 %2209
        %v2211 = vlaneseq
        %v2212 = vshrl.u32 %v2211, 7
        %v2213 = vadd.s32 %v2212, 8
        %2214 = vset.pattern.permute.xlu0 %v2213
        %2215 = vperm.xlu0 %2214, %v2204
        %v2216 = vpop.permute.xlu0 %2215
        %v2217 = vlaneseq
        %v2218 = vshrl.u32 %v2217, 7
        %v2219 = vadd.s32 %v2218, 16
        %2220 = vset.pattern.permute.xlu0 %v2219
        %2221 = vperm.xlu0 %2220, %v2204
        %v2222 = vpop.permute.xlu0 %2221
        %v2223 = vlaneseq
        %v2224 = vshrl.u32 %v2223, 7
        %v2225 = vadd.s32 %v2224, 24
        %2226 = vset.pattern.permute.xlu0 %v2225
        %2227 = vperm.xlu0 %2226, %v2204
        %v2228 = vpop.permute.xlu0 %2227
        %v2229 = vperm.slane %v2181, 0
        %v2230 = vlaneseq
        %v2231 = vshrl.u32 %v2230, 7
        %2233 = vset.pattern.permute.xlu0 %v2231
        %2234 = vperm.xlu0 %2233, %v2229
        %v2235 = vpop.permute.xlu0 %2234
        %v2236 = vlaneseq
        %v2237 = vshrl.u32 %v2236, 7
        %v2238 = vadd.s32 %v2237, 8
        %2239 = vset.pattern.permute.xlu0 %v2238
        %2240 = vperm.xlu0 %2239, %v2229
        %v2241 = vpop.permute.xlu0 %2240
        %v2242 = vlaneseq
        %v2243 = vshrl.u32 %v2242, 7
        %v2244 = vadd.s32 %v2243, 16
        %2245 = vset.pattern.permute.xlu0 %v2244
        %2246 = vperm.xlu0 %2245, %v2229
        %v2247 = vpop.permute.xlu0 %2246
        %v2248 = vlaneseq
        %v2249 = vshrl.u32 %v2248, 7
        %v2250 = vadd.s32 %v2249, 24
        %2251 = vset.pattern.permute.xlu0 %v2250
        %2252 = vperm.xlu0 %2251, %v2229
        %v2253 = vpop.permute.xlu0 %2252
        %v2254 = vperm.slane %v2182, 0
        %v2255 = vlaneseq
        %v2256 = vshrl.u32 %v2255, 7
        %2258 = vset.pattern.permute.xlu0 %v2256
        %2259 = vperm.xlu0 %2258, %v2254
        %v2260 = vpop.permute.xlu0 %2259
        %v2261 = vlaneseq
        %v2262 = vshrl.u32 %v2261, 7
        %v2263 = vadd.s32 %v2262, 8
        %2264 = vset.pattern.permute.xlu0 %v2263
        %2265 = vperm.xlu0 %2264, %v2254
        %v2266 = vpop.permute.xlu0 %2265
        %v2267 = vlaneseq
        %v2268 = vshrl.u32 %v2267, 7
        %v2269 = vadd.s32 %v2268, 16
        %2270 = vset.pattern.permute.xlu0 %v2269
        %2271 = vperm.xlu0 %2270, %v2254
        %v2272 = vpop.permute.xlu0 %2271
        %v2273 = vlaneseq
        %v2274 = vshrl.u32 %v2273, 7
        %v2275 = vadd.s32 %v2274, 24
        %2276 = vset.pattern.permute.xlu0 %v2275
        %2277 = vperm.xlu0 %2276, %v2254
        %v2278 = vpop.permute.xlu0 %2277
        %v2279 = vperm.slane %v2183, 0
        %v2280 = vlaneseq
        %v2281 = vshrl.u32 %v2280, 7
        %2283 = vset.pattern.permute.xlu0 %v2281
        %2284 = vperm.xlu0 %2283, %v2279
        %v2285 = vpop.permute.xlu0 %2284
        %v2286 = vlaneseq
        %v2287 = vshrl.u32 %v2286, 7
        %v2288 = vadd.s32 %v2287, 8
        %2289 = vset.pattern.permute.xlu0 %v2288
        %2290 = vperm.xlu0 %2289, %v2279
        %v2291 = vpop.permute.xlu0 %2290
        %v2292 = vlaneseq
        %v2293 = vshrl.u32 %v2292, 7
        %v2294 = vadd.s32 %v2293, 16
        %2295 = vset.pattern.permute.xlu0 %v2294
        %2296 = vperm.xlu0 %2295, %v2279
        %v2297 = vpop.permute.xlu0 %2296
        %v2298 = vlaneseq
        %v2299 = vshrl.u32 %v2298, 7
        %v2300 = vadd.s32 %v2299, 24
        %2301 = vset.pattern.permute.xlu0 %v2300
        %2302 = vperm.xlu0 %2301, %v2279
        %v2303 = vpop.permute.xlu0 %2302
        %v2304 = vperm.slane %v2184, 0
        %v2305 = vlaneseq
        %v2306 = vshrl.u32 %v2305, 7
        %2308 = vset.pattern.permute.xlu0 %v2306
        %2309 = vperm.xlu0 %2308, %v2304
        %v2310 = vpop.permute.xlu0 %2309
        %v2311 = vlaneseq
        %v2312 = vshrl.u32 %v2311, 7
        %v2313 = vadd.s32 %v2312, 8
        %2314 = vset.pattern.permute.xlu0 %v2313
        %2315 = vperm.xlu0 %2314, %v2304
        %v2316 = vpop.permute.xlu0 %2315
        %v2317 = vlaneseq
        %v2318 = vshrl.u32 %v2317, 7
        %v2319 = vadd.s32 %v2318, 16
        %2320 = vset.pattern.permute.xlu0 %v2319
        %2321 = vperm.xlu0 %2320, %v2304
        %v2322 = vpop.permute.xlu0 %2321
        %v2323 = vlaneseq
        %v2324 = vshrl.u32 %v2323, 7
        %v2325 = vadd.s32 %v2324, 24
        %2326 = vset.pattern.permute.xlu0 %v2325
        %2327 = vperm.xlu0 %2326, %v2304
        %v2328 = vpop.permute.xlu0 %2327
        %v2329 = vperm.slane %v2185, 0
        %v2330 = vlaneseq
        %v2331 = vshrl.u32 %v2330, 7
        %2333 = vset.pattern.permute.xlu0 %v2331
        %2334 = vperm.xlu0 %2333, %v2329
        %v2335 = vpop.permute.xlu0 %2334
        %v2336 = vlaneseq
        %v2337 = vshrl.u32 %v2336, 7
        %v2338 = vadd.s32 %v2337, 8
        %2339 = vset.pattern.permute.xlu0 %v2338
        %2340 = vperm.xlu0 %2339, %v2329
        %v2341 = vpop.permute.xlu0 %2340
        %v2342 = vlaneseq
        %v2343 = vshrl.u32 %v2342, 7
        %v2344 = vadd.s32 %v2343, 16
        %2345 = vset.pattern.permute.xlu0 %v2344
        %2346 = vperm.xlu0 %2345, %v2329
        %v2347 = vpop.permute.xlu0 %2346
        %v2348 = vlaneseq
        %v2349 = vshrl.u32 %v2348, 7
        %v2350 = vadd.s32 %v2349, 24
        %2351 = vset.pattern.permute.xlu0 %v2350
        %2352 = vperm.xlu0 %2351, %v2329
        %v2353 = vpop.permute.xlu0 %2352
        %v2354 = vperm.slane %v2186, 0
        %v2355 = vlaneseq
        %v2356 = vshrl.u32 %v2355, 7
        %2358 = vset.pattern.permute.xlu0 %v2356
        %2359 = vperm.xlu0 %2358, %v2354
        %v2360 = vpop.permute.xlu0 %2359
        %v2361 = vlaneseq
        %v2362 = vshrl.u32 %v2361, 7
        %v2363 = vadd.s32 %v2362, 8
        %2364 = vset.pattern.permute.xlu0 %v2363
        %2365 = vperm.xlu0 %2364, %v2354
        %v2366 = vpop.permute.xlu0 %2365
        %v2367 = vlaneseq
        %v2368 = vshrl.u32 %v2367, 7
        %v2369 = vadd.s32 %v2368, 16
        %2370 = vset.pattern.permute.xlu0 %v2369
        %2371 = vperm.xlu0 %2370, %v2354
        %v2372 = vpop.permute.xlu0 %2371
        %v2373 = vlaneseq
        %v2374 = vshrl.u32 %v2373, 7
        %v2375 = vadd.s32 %v2374, 24
        %2376 = vset.pattern.permute.xlu0 %v2375
        %2377 = vperm.xlu0 %2376, %v2354
        %v2378 = vpop.permute.xlu0 %2377
        %v2379 = vperm.slane %v2187, 0
        %v2380 = vlaneseq
        %v2381 = vshrl.u32 %v2380, 7
        %2383 = vset.pattern.permute.xlu0 %v2381
        %2384 = vperm.xlu0 %2383, %v2379
        %v2385 = vpop.permute.xlu0 %2384
        %v2386 = vlaneseq
        %v2387 = vshrl.u32 %v2386, 7
        %v2388 = vadd.s32 %v2387, 8
        %2389 = vset.pattern.permute.xlu0 %v2388
        %2390 = vperm.xlu0 %2389, %v2379
        %v2391 = vpop.permute.xlu0 %2390
        %v2392 = vlaneseq
        %v2393 = vshrl.u32 %v2392, 7
        %v2394 = vadd.s32 %v2393, 16
        %2395 = vset.pattern.permute.xlu0 %v2394
        %2396 = vperm.xlu0 %2395, %v2379
        %v2397 = vpop.permute.xlu0 %2396
        %v2398 = vlaneseq
        %v2399 = vshrl.u32 %v2398, 7
        %v2400 = vadd.s32 %v2399, 24
        %2401 = vset.pattern.permute.xlu0 %v2400
        %2402 = vperm.xlu0 %2401, %v2379
        %v2403 = vpop.permute.xlu0 %2402
        %v2436 = vmul.f32 %v2188, %v2210
        %v2437 = vmul.f32 %v2188, %v2216
        %v2438 = vmul.f32 %v2188, %v2222
        %v2439 = vmul.f32 %v2188, %v2228
        %v2440 = vmul.f32 %v2189, %v2235
        %v2441 = vmul.f32 %v2189, %v2241
        %v2442 = vmul.f32 %v2189, %v2247
        %v2443 = vmul.f32 %v2189, %v2253
        %v2444 = vmul.f32 %v2190, %v2260
        %v2445 = vmul.f32 %v2190, %v2266
        %v2446 = vmul.f32 %v2190, %v2272
        %v2447 = vmul.f32 %v2190, %v2278
        %v2448 = vmul.f32 %v2191, %v2285
        %v2449 = vmul.f32 %v2191, %v2291
        %v2450 = vmul.f32 %v2191, %v2297
        %v2451 = vmul.f32 %v2191, %v2303
        %v2452 = vmul.f32 %v2192, %v2310
        %v2453 = vmul.f32 %v2192, %v2316
        %v2454 = vmul.f32 %v2192, %v2322
        %v2455 = vmul.f32 %v2192, %v2328
        %v2456 = vmul.f32 %v2193, %v2335
        %v2457 = vmul.f32 %v2193, %v2341
        %v2458 = vmul.f32 %v2193, %v2347
        %v2459 = vmul.f32 %v2193, %v2353
        %v2460 = vmul.f32 %v2194, %v2360
        %v2461 = vmul.f32 %v2194, %v2366
        %v2462 = vmul.f32 %v2194, %v2372
        %v2463 = vmul.f32 %v2194, %v2378
        %v2464 = vmul.f32 %v2195, %v2385
        %v2465 = vmul.f32 %v2195, %v2391
        %v2466 = vmul.f32 %v2195, %v2397
        %v2467 = vmul.f32 %v2195, %v2403
        %v2468 = vadd.f32 %v2148, %v2436
        %v2469 = vadd.f32 %v2149, %v2437
        %v2470 = vadd.f32 %v2150, %v2438
        %v2471 = vadd.f32 %v2151, %v2439
        %v2472 = vadd.f32 %v2152, %v2440
        %v2473 = vadd.f32 %v2153, %v2441
        %v2474 = vadd.f32 %v2154, %v2442
        %v2475 = vadd.f32 %v2155, %v2443
        %v2476 = vadd.f32 %v2156, %v2444
        %v2477 = vadd.f32 %v2157, %v2445
        %v2478 = vadd.f32 %v2158, %v2446
        %v2479 = vadd.f32 %v2159, %v2447
        %v2480 = vadd.f32 %v2160, %v2448
        %v2481 = vadd.f32 %v2161, %v2449
        %v2482 = vadd.f32 %v2162, %v2450
        %v2483 = vadd.f32 %v2163, %v2451
        %v2484 = vadd.f32 %v2164, %v2452
        %v2485 = vadd.f32 %v2165, %v2453
        %v2486 = vadd.f32 %v2166, %v2454
        %v2487 = vadd.f32 %v2167, %v2455
        %v2488 = vadd.f32 %v2168, %v2456
        %v2489 = vadd.f32 %v2169, %v2457
        %v2490 = vadd.f32 %v2170, %v2458
        %v2491 = vadd.f32 %v2171, %v2459
        %v2492 = vadd.f32 %v2172, %v2460
        %v2493 = vadd.f32 %v2173, %v2461
        %v2494 = vadd.f32 %v2174, %v2462
        %v2495 = vadd.f32 %v2175, %v2463
        %v2496 = vadd.f32 %v2176, %v2464
        %v2497 = vadd.f32 %v2177, %v2465
        %v2498 = vadd.f32 %v2178, %v2466
        %v2499 = vadd.f32 %v2179, %v2467
        %v2500 = vld [vmem:[%s192 + $0x6] sm:$0x1]
        %v2501 = vld [vmem:[%s192 + $0xe] sm:$0x1]
        %v2502 = vld [vmem:[%s192 + $0x16] sm:$0x1]
        %v2503 = vld [vmem:[%s192 + $0x1e] sm:$0x1]
        %v2504 = vld [vmem:[%s192 + $0x26] sm:$0x1]
        %v2505 = vld [vmem:[%s192 + $0x2e] sm:$0x1]
        %v2506 = vld [vmem:[%s192 + $0x36] sm:$0x1]
        %v2507 = vld [vmem:[%s192 + $0x3e] sm:$0x1]
        %v2508 = vperm.slane %v506, 6
        %v2509 = vperm.slane %v521, 6
        %v2510 = vperm.slane %v536, 6
        %v2511 = vperm.slane %v551, 6
        %v2512 = vperm.slane %v566, 6
        %v2513 = vperm.slane %v581, 6
        %v2514 = vperm.slane %v596, 6
        %v2515 = vperm.slane %v611, 6
        %v2524 = vperm.slane %v2500, 0
        %v2525 = vlaneseq
        %v2526 = vshrl.u32 %v2525, 7
        %2528 = vset.pattern.permute.xlu0 %v2526
        %2529 = vperm.xlu0 %2528, %v2524
        %v2530 = vpop.permute.xlu0 %2529
        %v2531 = vlaneseq
        %v2532 = vshrl.u32 %v2531, 7
        %v2533 = vadd.s32 %v2532, 8
        %2534 = vset.pattern.permute.xlu0 %v2533
        %2535 = vperm.xlu0 %2534, %v2524
        %v2536 = vpop.permute.xlu0 %2535
        %v2537 = vlaneseq
        %v2538 = vshrl.u32 %v2537, 7
        %v2539 = vadd.s32 %v2538, 16
        %2540 = vset.pattern.permute.xlu0 %v2539
        %2541 = vperm.xlu0 %2540, %v2524
        %v2542 = vpop.permute.xlu0 %2541
        %v2543 = vlaneseq
        %v2544 = vshrl.u32 %v2543, 7
        %v2545 = vadd.s32 %v2544, 24
        %2546 = vset.pattern.permute.xlu0 %v2545
        %2547 = vperm.xlu0 %2546, %v2524
        %v2548 = vpop.permute.xlu0 %2547
        %v2549 = vperm.slane %v2501, 0
        %v2550 = vlaneseq
        %v2551 = vshrl.u32 %v2550, 7
        %2553 = vset.pattern.permute.xlu0 %v2551
        %2554 = vperm.xlu0 %2553, %v2549
        %v2555 = vpop.permute.xlu0 %2554
        %v2556 = vlaneseq
        %v2557 = vshrl.u32 %v2556, 7
        %v2558 = vadd.s32 %v2557, 8
        %2559 = vset.pattern.permute.xlu0 %v2558
        %2560 = vperm.xlu0 %2559, %v2549
        %v2561 = vpop.permute.xlu0 %2560
        %v2562 = vlaneseq
        %v2563 = vshrl.u32 %v2562, 7
        %v2564 = vadd.s32 %v2563, 16
        %2565 = vset.pattern.permute.xlu0 %v2564
        %2566 = vperm.xlu0 %2565, %v2549
        %v2567 = vpop.permute.xlu0 %2566
        %v2568 = vlaneseq
        %v2569 = vshrl.u32 %v2568, 7
        %v2570 = vadd.s32 %v2569, 24
        %2571 = vset.pattern.permute.xlu0 %v2570
        %2572 = vperm.xlu0 %2571, %v2549
        %v2573 = vpop.permute.xlu0 %2572
        %v2574 = vperm.slane %v2502, 0
        %v2575 = vlaneseq
        %v2576 = vshrl.u32 %v2575, 7
        %2578 = vset.pattern.permute.xlu0 %v2576
        %2579 = vperm.xlu0 %2578, %v2574
        %v2580 = vpop.permute.xlu0 %2579
        %v2581 = vlaneseq
        %v2582 = vshrl.u32 %v2581, 7
        %v2583 = vadd.s32 %v2582, 8
        %2584 = vset.pattern.permute.xlu0 %v2583
        %2585 = vperm.xlu0 %2584, %v2574
        %v2586 = vpop.permute.xlu0 %2585
        %v2587 = vlaneseq
        %v2588 = vshrl.u32 %v2587, 7
        %v2589 = vadd.s32 %v2588, 16
        %2590 = vset.pattern.permute.xlu0 %v2589
        %2591 = vperm.xlu0 %2590, %v2574
        %v2592 = vpop.permute.xlu0 %2591
        %v2593 = vlaneseq
        %v2594 = vshrl.u32 %v2593, 7
        %v2595 = vadd.s32 %v2594, 24
        %2596 = vset.pattern.permute.xlu0 %v2595
        %2597 = vperm.xlu0 %2596, %v2574
        %v2598 = vpop.permute.xlu0 %2597
        %v2599 = vperm.slane %v2503, 0
        %v2600 = vlaneseq
        %v2601 = vshrl.u32 %v2600, 7
        %2603 = vset.pattern.permute.xlu0 %v2601
        %2604 = vperm.xlu0 %2603, %v2599
        %v2605 = vpop.permute.xlu0 %2604
        %v2606 = vlaneseq
        %v2607 = vshrl.u32 %v2606, 7
        %v2608 = vadd.s32 %v2607, 8
        %2609 = vset.pattern.permute.xlu0 %v2608
        %2610 = vperm.xlu0 %2609, %v2599
        %v2611 = vpop.permute.xlu0 %2610
        %v2612 = vlaneseq
        %v2613 = vshrl.u32 %v2612, 7
        %v2614 = vadd.s32 %v2613, 16
        %2615 = vset.pattern.permute.xlu0 %v2614
        %2616 = vperm.xlu0 %2615, %v2599
        %v2617 = vpop.permute.xlu0 %2616
        %v2618 = vlaneseq
        %v2619 = vshrl.u32 %v2618, 7
        %v2620 = vadd.s32 %v2619, 24
        %2621 = vset.pattern.permute.xlu0 %v2620
        %2622 = vperm.xlu0 %2621, %v2599
        %v2623 = vpop.permute.xlu0 %2622
        %v2624 = vperm.slane %v2504, 0
        %v2625 = vlaneseq
        %v2626 = vshrl.u32 %v2625, 7
        %2628 = vset.pattern.permute.xlu0 %v2626
        %2629 = vperm.xlu0 %2628, %v2624
        %v2630 = vpop.permute.xlu0 %2629
        %v2631 = vlaneseq
        %v2632 = vshrl.u32 %v2631, 7
        %v2633 = vadd.s32 %v2632, 8
        %2634 = vset.pattern.permute.xlu0 %v2633
        %2635 = vperm.xlu0 %2634, %v2624
        %v2636 = vpop.permute.xlu0 %2635
        %v2637 = vlaneseq
        %v2638 = vshrl.u32 %v2637, 7
        %v2639 = vadd.s32 %v2638, 16
        %2640 = vset.pattern.permute.xlu0 %v2639
        %2641 = vperm.xlu0 %2640, %v2624
        %v2642 = vpop.permute.xlu0 %2641
        %v2643 = vlaneseq
        %v2644 = vshrl.u32 %v2643, 7
        %v2645 = vadd.s32 %v2644, 24
        %2646 = vset.pattern.permute.xlu0 %v2645
        %2647 = vperm.xlu0 %2646, %v2624
        %v2648 = vpop.permute.xlu0 %2647
        %v2649 = vperm.slane %v2505, 0
        %v2650 = vlaneseq
        %v2651 = vshrl.u32 %v2650, 7
        %2653 = vset.pattern.permute.xlu0 %v2651
        %2654 = vperm.xlu0 %2653, %v2649
        %v2655 = vpop.permute.xlu0 %2654
        %v2656 = vlaneseq
        %v2657 = vshrl.u32 %v2656, 7
        %v2658 = vadd.s32 %v2657, 8
        %2659 = vset.pattern.permute.xlu0 %v2658
        %2660 = vperm.xlu0 %2659, %v2649
        %v2661 = vpop.permute.xlu0 %2660
        %v2662 = vlaneseq
        %v2663 = vshrl.u32 %v2662, 7
        %v2664 = vadd.s32 %v2663, 16
        %2665 = vset.pattern.permute.xlu0 %v2664
        %2666 = vperm.xlu0 %2665, %v2649
        %v2667 = vpop.permute.xlu0 %2666
        %v2668 = vlaneseq
        %v2669 = vshrl.u32 %v2668, 7
        %v2670 = vadd.s32 %v2669, 24
        %2671 = vset.pattern.permute.xlu0 %v2670
        %2672 = vperm.xlu0 %2671, %v2649
        %v2673 = vpop.permute.xlu0 %2672
        %v2674 = vperm.slane %v2506, 0
        %v2675 = vlaneseq
        %v2676 = vshrl.u32 %v2675, 7
        %2678 = vset.pattern.permute.xlu0 %v2676
        %2679 = vperm.xlu0 %2678, %v2674
        %v2680 = vpop.permute.xlu0 %2679
        %v2681 = vlaneseq
        %v2682 = vshrl.u32 %v2681, 7
        %v2683 = vadd.s32 %v2682, 8
        %2684 = vset.pattern.permute.xlu0 %v2683
        %2685 = vperm.xlu0 %2684, %v2674
        %v2686 = vpop.permute.xlu0 %2685
        %v2687 = vlaneseq
        %v2688 = vshrl.u32 %v2687, 7
        %v2689 = vadd.s32 %v2688, 16
        %2690 = vset.pattern.permute.xlu0 %v2689
        %2691 = vperm.xlu0 %2690, %v2674
        %v2692 = vpop.permute.xlu0 %2691
        %v2693 = vlaneseq
        %v2694 = vshrl.u32 %v2693, 7
        %v2695 = vadd.s32 %v2694, 24
        %2696 = vset.pattern.permute.xlu0 %v2695
        %2697 = vperm.xlu0 %2696, %v2674
        %v2698 = vpop.permute.xlu0 %2697
        %v2699 = vperm.slane %v2507, 0
        %v2700 = vlaneseq
        %v2701 = vshrl.u32 %v2700, 7
        %2703 = vset.pattern.permute.xlu0 %v2701
        %2704 = vperm.xlu0 %2703, %v2699
        %v2705 = vpop.permute.xlu0 %2704
        %v2706 = vlaneseq
        %v2707 = vshrl.u32 %v2706, 7
        %v2708 = vadd.s32 %v2707, 8
        %2709 = vset.pattern.permute.xlu0 %v2708
        %2710 = vperm.xlu0 %2709, %v2699
        %v2711 = vpop.permute.xlu0 %2710
        %v2712 = vlaneseq
        %v2713 = vshrl.u32 %v2712, 7
        %v2714 = vadd.s32 %v2713, 16
        %2715 = vset.pattern.permute.xlu0 %v2714
        %2716 = vperm.xlu0 %2715, %v2699
        %v2717 = vpop.permute.xlu0 %2716
        %v2718 = vlaneseq
        %v2719 = vshrl.u32 %v2718, 7
        %v2720 = vadd.s32 %v2719, 24
        %2721 = vset.pattern.permute.xlu0 %v2720
        %2722 = vperm.xlu0 %2721, %v2699
        %v2723 = vpop.permute.xlu0 %2722
        %v2756 = vmul.f32 %v2508, %v2530
        %v2757 = vmul.f32 %v2508, %v2536
        %v2758 = vmul.f32 %v2508, %v2542
        %v2759 = vmul.f32 %v2508, %v2548
        %v2760 = vmul.f32 %v2509, %v2555
        %v2761 = vmul.f32 %v2509, %v2561
        %v2762 = vmul.f32 %v2509, %v2567
        %v2763 = vmul.f32 %v2509, %v2573
        %v2764 = vmul.f32 %v2510, %v2580
        %v2765 = vmul.f32 %v2510, %v2586
        %v2766 = vmul.f32 %v2510, %v2592
        %v2767 = vmul.f32 %v2510, %v2598
        %v2768 = vmul.f32 %v2511, %v2605
        %v2769 = vmul.f32 %v2511, %v2611
        %v2770 = vmul.f32 %v2511, %v2617
        %v2771 = vmul.f32 %v2511, %v2623
        %v2772 = vmul.f32 %v2512, %v2630
        %v2773 = vmul.f32 %v2512, %v2636
        %v2774 = vmul.f32 %v2512, %v2642
        %v2775 = vmul.f32 %v2512, %v2648
        %v2776 = vmul.f32 %v2513, %v2655
        %v2777 = vmul.f32 %v2513, %v2661
        %v2778 = vmul.f32 %v2513, %v2667
        %v2779 = vmul.f32 %v2513, %v2673
        %v2780 = vmul.f32 %v2514, %v2680
        %v2781 = vmul.f32 %v2514, %v2686
        %v2782 = vmul.f32 %v2514, %v2692
        %v2783 = vmul.f32 %v2514, %v2698
        %v2784 = vmul.f32 %v2515, %v2705
        %v2785 = vmul.f32 %v2515, %v2711
        %v2786 = vmul.f32 %v2515, %v2717
        %v2787 = vmul.f32 %v2515, %v2723
        %v2788 = vadd.f32 %v2468, %v2756
        %v2789 = vadd.f32 %v2469, %v2757
        %v2790 = vadd.f32 %v2470, %v2758
        %v2791 = vadd.f32 %v2471, %v2759
        %v2792 = vadd.f32 %v2472, %v2760
        %v2793 = vadd.f32 %v2473, %v2761
        %v2794 = vadd.f32 %v2474, %v2762
        %v2795 = vadd.f32 %v2475, %v2763
        %v2796 = vadd.f32 %v2476, %v2764
        %v2797 = vadd.f32 %v2477, %v2765
        %v2798 = vadd.f32 %v2478, %v2766
        %v2799 = vadd.f32 %v2479, %v2767
        %v2800 = vadd.f32 %v2480, %v2768
        %v2801 = vadd.f32 %v2481, %v2769
        %v2802 = vadd.f32 %v2482, %v2770
        %v2803 = vadd.f32 %v2483, %v2771
        %v2804 = vadd.f32 %v2484, %v2772
        %v2805 = vadd.f32 %v2485, %v2773
        %v2806 = vadd.f32 %v2486, %v2774
        %v2807 = vadd.f32 %v2487, %v2775
        %v2808 = vadd.f32 %v2488, %v2776
        %v2809 = vadd.f32 %v2489, %v2777
        %v2810 = vadd.f32 %v2490, %v2778
        %v2811 = vadd.f32 %v2491, %v2779
        %v2812 = vadd.f32 %v2492, %v2780
        %v2813 = vadd.f32 %v2493, %v2781
        %v2814 = vadd.f32 %v2494, %v2782
        %v2815 = vadd.f32 %v2495, %v2783
        %v2816 = vadd.f32 %v2496, %v2784
        %v2817 = vadd.f32 %v2497, %v2785
        %v2818 = vadd.f32 %v2498, %v2786
        %v2819 = vadd.f32 %v2499, %v2787
        %v2820 = vld [vmem:[%s192 + $0x7] sm:$0x1]
        %v2821 = vld [vmem:[%s192 + $0xf] sm:$0x1]
        %v2822 = vld [vmem:[%s192 + $0x17] sm:$0x1]
        %v2823 = vld [vmem:[%s192 + $0x1f] sm:$0x1]
        %v2824 = vld [vmem:[%s192 + $0x27] sm:$0x1]
        %v2825 = vld [vmem:[%s192 + $0x2f] sm:$0x1]
        %v2826 = vld [vmem:[%s192 + $0x37] sm:$0x1]
        %v2827 = vld [vmem:[%s192 + $0x3f] sm:$0x1]
        %v2828 = vperm.slane %v506, 7
        %v2829 = vperm.slane %v521, 7
        %v2830 = vperm.slane %v536, 7
        %v2831 = vperm.slane %v551, 7
        %v2832 = vperm.slane %v566, 7
        %v2833 = vperm.slane %v581, 7
        %v2834 = vperm.slane %v596, 7
        %v2835 = vperm.slane %v611, 7
        %v2844 = vperm.slane %v2820, 0
        %v2845 = vlaneseq
        %v2846 = vshrl.u32 %v2845, 7
        %2848 = vset.pattern.permute.xlu0 %v2846
        %2849 = vperm.xlu0 %2848, %v2844
        %v2850 = vpop.permute.xlu0 %2849
        %v2851 = vlaneseq
        %v2852 = vshrl.u32 %v2851, 7
        %v2853 = vadd.s32 %v2852, 8
        %2854 = vset.pattern.permute.xlu0 %v2853
        %2855 = vperm.xlu0 %2854, %v2844
        %v2856 = vpop.permute.xlu0 %2855
        %v2857 = vlaneseq
        %v2858 = vshrl.u32 %v2857, 7
        %v2859 = vadd.s32 %v2858, 16
        %2860 = vset.pattern.permute.xlu0 %v2859
        %2861 = vperm.xlu0 %2860, %v2844
        %v2862 = vpop.permute.xlu0 %2861
        %v2863 = vlaneseq
        %v2864 = vshrl.u32 %v2863, 7
        %v2865 = vadd.s32 %v2864, 24
        %2866 = vset.pattern.permute.xlu0 %v2865
        %2867 = vperm.xlu0 %2866, %v2844
        %v2868 = vpop.permute.xlu0 %2867
        %v2869 = vperm.slane %v2821, 0
        %v2870 = vlaneseq
        %v2871 = vshrl.u32 %v2870, 7
        %2873 = vset.pattern.permute.xlu0 %v2871
        %2874 = vperm.xlu0 %2873, %v2869
        %v2875 = vpop.permute.xlu0 %2874
        %v2876 = vlaneseq
        %v2877 = vshrl.u32 %v2876, 7
        %v2878 = vadd.s32 %v2877, 8
        %2879 = vset.pattern.permute.xlu0 %v2878
        %2880 = vperm.xlu0 %2879, %v2869
        %v2881 = vpop.permute.xlu0 %2880
        %v2882 = vlaneseq
        %v2883 = vshrl.u32 %v2882, 7
        %v2884 = vadd.s32 %v2883, 16
        %2885 = vset.pattern.permute.xlu0 %v2884
        %2886 = vperm.xlu0 %2885, %v2869
        %v2887 = vpop.permute.xlu0 %2886
        %v2888 = vlaneseq
        %v2889 = vshrl.u32 %v2888, 7
        %v2890 = vadd.s32 %v2889, 24
        %2891 = vset.pattern.permute.xlu0 %v2890
        %2892 = vperm.xlu0 %2891, %v2869
        %v2893 = vpop.permute.xlu0 %2892
        %v2894 = vperm.slane %v2822, 0
        %v2895 = vlaneseq
        %v2896 = vshrl.u32 %v2895, 7
        %2898 = vset.pattern.permute.xlu0 %v2896
        %2899 = vperm.xlu0 %2898, %v2894
        %v2900 = vpop.permute.xlu0 %2899
        %v2901 = vlaneseq
        %v2902 = vshrl.u32 %v2901, 7
        %v2903 = vadd.s32 %v2902, 8
        %2904 = vset.pattern.permute.xlu0 %v2903
        %2905 = vperm.xlu0 %2904, %v2894
        %v2906 = vpop.permute.xlu0 %2905
        %v2907 = vlaneseq
        %v2908 = vshrl.u32 %v2907, 7
        %v2909 = vadd.s32 %v2908, 16
        %2910 = vset.pattern.permute.xlu0 %v2909
        %2911 = vperm.xlu0 %2910, %v2894
        %v2912 = vpop.permute.xlu0 %2911
        %v2913 = vlaneseq
        %v2914 = vshrl.u32 %v2913, 7
        %v2915 = vadd.s32 %v2914, 24
        %2916 = vset.pattern.permute.xlu0 %v2915
        %2917 = vperm.xlu0 %2916, %v2894
        %v2918 = vpop.permute.xlu0 %2917
        %v2919 = vperm.slane %v2823, 0
        %v2920 = vlaneseq
        %v2921 = vshrl.u32 %v2920, 7
        %2923 = vset.pattern.permute.xlu0 %v2921
        %2924 = vperm.xlu0 %2923, %v2919
        %v2925 = vpop.permute.xlu0 %2924
        %v2926 = vlaneseq
        %v2927 = vshrl.u32 %v2926, 7
        %v2928 = vadd.s32 %v2927, 8
        %2929 = vset.pattern.permute.xlu0 %v2928
        %2930 = vperm.xlu0 %2929, %v2919
        %v2931 = vpop.permute.xlu0 %2930
        %v2932 = vlaneseq
        %v2933 = vshrl.u32 %v2932, 7
        %v2934 = vadd.s32 %v2933, 16
        %2935 = vset.pattern.permute.xlu0 %v2934
        %2936 = vperm.xlu0 %2935, %v2919
        %v2937 = vpop.permute.xlu0 %2936
        %v2938 = vlaneseq
        %v2939 = vshrl.u32 %v2938, 7
        %v2940 = vadd.s32 %v2939, 24
        %2941 = vset.pattern.permute.xlu0 %v2940
        %2942 = vperm.xlu0 %2941, %v2919
        %v2943 = vpop.permute.xlu0 %2942
        %v2944 = vperm.slane %v2824, 0
        %v2945 = vlaneseq
        %v2946 = vshrl.u32 %v2945, 7
        %2948 = vset.pattern.permute.xlu0 %v2946
        %2949 = vperm.xlu0 %2948, %v2944
        %v2950 = vpop.permute.xlu0 %2949
        %v2951 = vlaneseq
        %v2952 = vshrl.u32 %v2951, 7
        %v2953 = vadd.s32 %v2952, 8
        %2954 = vset.pattern.permute.xlu0 %v2953
        %2955 = vperm.xlu0 %2954, %v2944
        %v2956 = vpop.permute.xlu0 %2955
        %v2957 = vlaneseq
        %v2958 = vshrl.u32 %v2957, 7
        %v2959 = vadd.s32 %v2958, 16
        %2960 = vset.pattern.permute.xlu0 %v2959
        %2961 = vperm.xlu0 %2960, %v2944
        %v2962 = vpop.permute.xlu0 %2961
        %v2963 = vlaneseq
        %v2964 = vshrl.u32 %v2963, 7
        %v2965 = vadd.s32 %v2964, 24
        %2966 = vset.pattern.permute.xlu0 %v2965
        %2967 = vperm.xlu0 %2966, %v2944
        %v2968 = vpop.permute.xlu0 %2967
        %v2969 = vperm.slane %v2825, 0
        %v2970 = vlaneseq
        %v2971 = vshrl.u32 %v2970, 7
        %2973 = vset.pattern.permute.xlu0 %v2971
        %2974 = vperm.xlu0 %2973, %v2969
        %v2975 = vpop.permute.xlu0 %2974
        %v2976 = vlaneseq
        %v2977 = vshrl.u32 %v2976, 7
        %v2978 = vadd.s32 %v2977, 8
        %2979 = vset.pattern.permute.xlu0 %v2978
        %2980 = vperm.xlu0 %2979, %v2969
        %v2981 = vpop.permute.xlu0 %2980
        %v2982 = vlaneseq
        %v2983 = vshrl.u32 %v2982, 7
        %v2984 = vadd.s32 %v2983, 16
        %2985 = vset.pattern.permute.xlu0 %v2984
        %2986 = vperm.xlu0 %2985, %v2969
        %v2987 = vpop.permute.xlu0 %2986
        %v2988 = vlaneseq
        %v2989 = vshrl.u32 %v2988, 7
        %v2990 = vadd.s32 %v2989, 24
        %2991 = vset.pattern.permute.xlu0 %v2990
        %2992 = vperm.xlu0 %2991, %v2969
        %v2993 = vpop.permute.xlu0 %2992
        %v2994 = vperm.slane %v2826, 0
        %v2995 = vlaneseq
        %v2996 = vshrl.u32 %v2995, 7
        %2998 = vset.pattern.permute.xlu0 %v2996
        %2999 = vperm.xlu0 %2998, %v2994
        %v3000 = vpop.permute.xlu0 %2999
        %v3001 = vlaneseq
        %v3002 = vshrl.u32 %v3001, 7
        %v3003 = vadd.s32 %v3002, 8
        %3004 = vset.pattern.permute.xlu0 %v3003
        %3005 = vperm.xlu0 %3004, %v2994
        %v3006 = vpop.permute.xlu0 %3005
        %v3007 = vlaneseq
        %v3008 = vshrl.u32 %v3007, 7
        %v3009 = vadd.s32 %v3008, 16
        %3010 = vset.pattern.permute.xlu0 %v3009
        %3011 = vperm.xlu0 %3010, %v2994
        %v3012 = vpop.permute.xlu0 %3011
        %v3013 = vlaneseq
        %v3014 = vshrl.u32 %v3013, 7
        %v3015 = vadd.s32 %v3014, 24
        %3016 = vset.pattern.permute.xlu0 %v3015
        %3017 = vperm.xlu0 %3016, %v2994
        %v3018 = vpop.permute.xlu0 %3017
        %v3019 = vperm.slane %v2827, 0
        %v3020 = vlaneseq
        %v3021 = vshrl.u32 %v3020, 7
        %3023 = vset.pattern.permute.xlu0 %v3021
        %3024 = vperm.xlu0 %3023, %v3019
        %v3025 = vpop.permute.xlu0 %3024
        %v3026 = vlaneseq
        %v3027 = vshrl.u32 %v3026, 7
        %v3028 = vadd.s32 %v3027, 8
        %3029 = vset.pattern.permute.xlu0 %v3028
        %3030 = vperm.xlu0 %3029, %v3019
        %v3031 = vpop.permute.xlu0 %3030
        %v3032 = vlaneseq
        %v3033 = vshrl.u32 %v3032, 7
        %v3034 = vadd.s32 %v3033, 16
        %3035 = vset.pattern.permute.xlu0 %v3034
        %3036 = vperm.xlu0 %3035, %v3019
        %v3037 = vpop.permute.xlu0 %3036
        %v3038 = vlaneseq
        %v3039 = vshrl.u32 %v3038, 7
        %v3040 = vadd.s32 %v3039, 24
        %3041 = vset.pattern.permute.xlu0 %v3040
        %3042 = vperm.xlu0 %3041, %v3019
        %v3043 = vpop.permute.xlu0 %3042
        %v3076 = vmul.f32 %v2828, %v2850
        %v3077 = vmul.f32 %v2828, %v2856
        %v3078 = vmul.f32 %v2828, %v2862
        %v3079 = vmul.f32 %v2828, %v2868
        %v3080 = vmul.f32 %v2829, %v2875
        %v3081 = vmul.f32 %v2829, %v2881
        %v3082 = vmul.f32 %v2829, %v2887
        %v3083 = vmul.f32 %v2829, %v2893
        %v3084 = vmul.f32 %v2830, %v2900
        %v3085 = vmul.f32 %v2830, %v2906
        %v3086 = vmul.f32 %v2830, %v2912
        %v3087 = vmul.f32 %v2830, %v2918
        %v3088 = vmul.f32 %v2831, %v2925
        %v3089 = vmul.f32 %v2831, %v2931
        %v3090 = vmul.f32 %v2831, %v2937
        %v3091 = vmul.f32 %v2831, %v2943
        %v3092 = vmul.f32 %v2832, %v2950
        %v3093 = vmul.f32 %v2832, %v2956
        %v3094 = vmul.f32 %v2832, %v2962
        %v3095 = vmul.f32 %v2832, %v2968
        %v3096 = vmul.f32 %v2833, %v2975
        %v3097 = vmul.f32 %v2833, %v2981
        %v3098 = vmul.f32 %v2833, %v2987
        %v3099 = vmul.f32 %v2833, %v2993
        %v3100 = vmul.f32 %v2834, %v3000
        %v3101 = vmul.f32 %v2834, %v3006
        %v3102 = vmul.f32 %v2834, %v3012
        %v3103 = vmul.f32 %v2834, %v3018
        %v3104 = vmul.f32 %v2835, %v3025
        %v3105 = vmul.f32 %v2835, %v3031
        %v3106 = vmul.f32 %v2835, %v3037
        %v3107 = vmul.f32 %v2835, %v3043
        %v3108 = vadd.f32 %v2788, %v3076
        %v3109 = vadd.f32 %v2789, %v3077
        %v3110 = vadd.f32 %v2790, %v3078
        %v3111 = vadd.f32 %v2791, %v3079
        %v3112 = vadd.f32 %v2792, %v3080
        %v3113 = vadd.f32 %v2793, %v3081
        %v3114 = vadd.f32 %v2794, %v3082
        %v3115 = vadd.f32 %v2795, %v3083
        %v3116 = vadd.f32 %v2796, %v3084
        %v3117 = vadd.f32 %v2797, %v3085
        %v3118 = vadd.f32 %v2798, %v3086
        %v3119 = vadd.f32 %v2799, %v3087
        %v3120 = vadd.f32 %v2800, %v3088
        %v3121 = vadd.f32 %v2801, %v3089
        %v3122 = vadd.f32 %v2802, %v3090
        %v3123 = vadd.f32 %v2803, %v3091
        %v3124 = vadd.f32 %v2804, %v3092
        %v3125 = vadd.f32 %v2805, %v3093
        %v3126 = vadd.f32 %v2806, %v3094
        %v3127 = vadd.f32 %v2807, %v3095
        %v3128 = vadd.f32 %v2808, %v3096
        %v3129 = vadd.f32 %v2809, %v3097
        %v3130 = vadd.f32 %v2810, %v3098
        %v3131 = vadd.f32 %v2811, %v3099
        %v3132 = vadd.f32 %v2812, %v3100
        %v3133 = vadd.f32 %v2813, %v3101
        %v3134 = vadd.f32 %v2814, %v3102
        %v3135 = vadd.f32 %v2815, %v3103
        %v3136 = vadd.f32 %v2816, %v3104
        %v3137 = vadd.f32 %v2817, %v3105
        %v3138 = vadd.f32 %v2818, %v3106
        %v3139 = vadd.f32 %v2819, %v3107
        %3172 = vset.pattern.permute.xlu0 0
        %3173 = vperm.xlu0 %3172, %v3108
        %v3174 = vpop.permute.xlu0 %3173
        %3175 = vset.pattern.permute.xlu0 0
        %3176 = vperm.xlu0 %3175, %v3109
        %v3177 = vpop.permute.xlu0 %3176
        %3178 = vset.pattern.permute.xlu0 0
        %3179 = vperm.xlu0 %3178, %v3110
        %v3180 = vpop.permute.xlu0 %3179
        %3181 = vset.pattern.permute.xlu0 0
        %3182 = vperm.xlu0 %3181, %v3111
        %v3183 = vpop.permute.xlu0 %3182
        %3184 = vset.pattern.permute.xlu0 0
        %3185 = vperm.xlu0 %3184, %v3112
        %v3186 = vpop.permute.xlu0 %3185
        %3187 = vset.pattern.permute.xlu0 0
        %3188 = vperm.xlu0 %3187, %v3113
        %v3189 = vpop.permute.xlu0 %3188
        %3190 = vset.pattern.permute.xlu0 0
        %3191 = vperm.xlu0 %3190, %v3114
        %v3192 = vpop.permute.xlu0 %3191
        %3193 = vset.pattern.permute.xlu0 0
        %3194 = vperm.xlu0 %3193, %v3115
        %v3195 = vpop.permute.xlu0 %3194
        %3196 = vset.pattern.permute.xlu0 0
        %3197 = vperm.xlu0 %3196, %v3116
        %v3198 = vpop.permute.xlu0 %3197
        %3199 = vset.pattern.permute.xlu0 0
        %3200 = vperm.xlu0 %3199, %v3117
        %v3201 = vpop.permute.xlu0 %3200
        %3202 = vset.pattern.permute.xlu0 0
        %3203 = vperm.xlu0 %3202, %v3118
        %v3204 = vpop.permute.xlu0 %3203
        %3205 = vset.pattern.permute.xlu0 0
        %3206 = vperm.xlu0 %3205, %v3119
        %v3207 = vpop.permute.xlu0 %3206
        %3208 = vset.pattern.permute.xlu0 0
        %3209 = vperm.xlu0 %3208, %v3120
        %v3210 = vpop.permute.xlu0 %3209
        %3211 = vset.pattern.permute.xlu0 0
        %3212 = vperm.xlu0 %3211, %v3121
        %v3213 = vpop.permute.xlu0 %3212
        %3214 = vset.pattern.permute.xlu0 0
        %3215 = vperm.xlu0 %3214, %v3122
        %v3216 = vpop.permute.xlu0 %3215
        %3217 = vset.pattern.permute.xlu0 0
        %3218 = vperm.xlu0 %3217, %v3123
        %v3219 = vpop.permute.xlu0 %3218
        %3220 = vset.pattern.permute.xlu0 0
        %3221 = vperm.xlu0 %3220, %v3124
        %v3222 = vpop.permute.xlu0 %3221
        %3223 = vset.pattern.permute.xlu0 0
        %3224 = vperm.xlu0 %3223, %v3125
        %v3225 = vpop.permute.xlu0 %3224
        %3226 = vset.pattern.permute.xlu0 0
        %3227 = vperm.xlu0 %3226, %v3126
        %v3228 = vpop.permute.xlu0 %3227
        %3229 = vset.pattern.permute.xlu0 0
        %3230 = vperm.xlu0 %3229, %v3127
        %v3231 = vpop.permute.xlu0 %3230
        %3232 = vset.pattern.permute.xlu0 0
        %3233 = vperm.xlu0 %3232, %v3128
        %v3234 = vpop.permute.xlu0 %3233
        %3235 = vset.pattern.permute.xlu0 0
        %3236 = vperm.xlu0 %3235, %v3129
        %v3237 = vpop.permute.xlu0 %3236
        %3238 = vset.pattern.permute.xlu0 0
        %3239 = vperm.xlu0 %3238, %v3130
        %v3240 = vpop.permute.xlu0 %3239
        %3241 = vset.pattern.permute.xlu0 0
        %3242 = vperm.xlu0 %3241, %v3131
        %v3243 = vpop.permute.xlu0 %3242
        %3244 = vset.pattern.permute.xlu0 0
        %3245 = vperm.xlu0 %3244, %v3132
        %v3246 = vpop.permute.xlu0 %3245
        %3247 = vset.pattern.permute.xlu0 0
        %3248 = vperm.xlu0 %3247, %v3133
        %v3249 = vpop.permute.xlu0 %3248
        %3250 = vset.pattern.permute.xlu0 0
        %3251 = vperm.xlu0 %3250, %v3134
        %v3252 = vpop.permute.xlu0 %3251
        %3253 = vset.pattern.permute.xlu0 0
        %3254 = vperm.xlu0 %3253, %v3135
        %v3255 = vpop.permute.xlu0 %3254
        %3256 = vset.pattern.permute.xlu0 0
        %3257 = vperm.xlu0 %3256, %v3136
        %v3258 = vpop.permute.xlu0 %3257
        %3259 = vset.pattern.permute.xlu0 0
        %3260 = vperm.xlu0 %3259, %v3137
        %v3261 = vpop.permute.xlu0 %3260
        %3262 = vset.pattern.permute.xlu0 0
        %3263 = vperm.xlu0 %3262, %v3138
        %v3264 = vpop.permute.xlu0 %3263
        %3265 = vset.pattern.permute.xlu0 0
        %3266 = vperm.xlu0 %3265, %v3139
        %v3267 = vpop.permute.xlu0 %3266
        %v3268 = vperm.slane %v3174, %v355
        %v3269 = vadd.s32 %v355, 4294967288
        %v3270 = vperm.slane %v3177, %v3269
        %vm3271 = vcmask 130112
        %v3272 = vsel %vm3271, %v3270, %v3268
        %v3273 = vadd.s32 %v355, 4294967280
        %v3274 = vperm.slane %v3180, %v3273
        %vm3275 = vcmask 195712
        %v3276 = vsel %vm3275, %v3274, %v3272
        %v3277 = vadd.s32 %v355, 4294967272
        %v3278 = vperm.slane %v3183, %v3277
        %vm3279 = vcmask 261312
        %v3280 = vsel %vm3279, %v3278, %v3276
        %v3281 = vperm.slane %v3186, %v355
        %v3282 = vperm.slane %v3189, %v3269
        %v3283 = vsel %vm3271, %v3282, %v3281
        %v3284 = vperm.slane %v3192, %v3273
        %v3285 = vsel %vm3275, %v3284, %v3283
        %v3286 = vperm.slane %v3195, %v3277
        %v3287 = vsel %vm3279, %v3286, %v3285
        %v3288 = vperm.slane %v3198, %v355
        %v3289 = vperm.slane %v3201, %v3269
        %v3290 = vsel %vm3271, %v3289, %v3288
        %v3291 = vperm.slane %v3204, %v3273
        %v3292 = vsel %vm3275, %v3291, %v3290
        %v3293 = vperm.slane %v3207, %v3277
        %v3294 = vsel %vm3279, %v3293, %v3292
        %v3295 = vperm.slane %v3210, %v355
        %v3296 = vperm.slane %v3213, %v3269
        %v3297 = vsel %vm3271, %v3296, %v3295
        %v3298 = vperm.slane %v3216, %v3273
        %v3299 = vsel %vm3275, %v3298, %v3297
        %v3300 = vperm.slane %v3219, %v3277
        %v3301 = vsel %vm3279, %v3300, %v3299
        %v3302 = vperm.slane %v3222, %v355
        %v3303 = vperm.slane %v3225, %v3269
        %v3304 = vsel %vm3271, %v3303, %v3302
        %v3305 = vperm.slane %v3228, %v3273
        %v3306 = vsel %vm3275, %v3305, %v3304
        %v3307 = vperm.slane %v3231, %v3277
        %v3308 = vsel %vm3279, %v3307, %v3306
        %v3309 = vperm.slane %v3234, %v355
        %v3310 = vperm.slane %v3237, %v3269
        %v3311 = vsel %vm3271, %v3310, %v3309
        %v3312 = vperm.slane %v3240, %v3273
        %v3313 = vsel %vm3275, %v3312, %v3311
        %v3314 = vperm.slane %v3243, %v3277
        %v3315 = vsel %vm3279, %v3314, %v3313
        %v3316 = vperm.slane %v3246, %v355
        %v3317 = vperm.slane %v3249, %v3269
        %v3318 = vsel %vm3271, %v3317, %v3316
        %v3319 = vperm.slane %v3252, %v3273
        %v3320 = vsel %vm3275, %v3319, %v3318
        %v3321 = vperm.slane %v3255, %v3277
        %v3322 = vsel %vm3279, %v3321, %v3320
        %v3323 = vperm.slane %v3258, %v355
        %v3324 = vperm.slane %v3261, %v3269
        %v3325 = vsel %vm3271, %v3324, %v3323
        %v3326 = vperm.slane %v3264, %v3273
        %v3327 = vsel %vm3275, %v3326, %v3325
        %v3328 = vperm.slane %v3267, %v3277
        %v3329 = vsel %vm3279, %v3328, %v3327
        %v3330 = vsel %vm364, %v3287, %v3280
        %v3331 = vsel %vm366, %v3294, %v3330
        %v3332 = vsel %vm368, %v3301, %v3331
        %v3333 = vsel %vm370, %v3308, %v3332
        %v3334 = vsel %vm372, %v3315, %v3333
        %v3335 = vsel %vm374, %v3322, %v3334
        %v3336 = vsel %vm376, %v3329, %v3335
        %3338 = vst.msk [vmem:[%s217] sm:$0xff] %vm235, %v3336
        %s3339 = sand.u32 %s118, 1
        %s3340 = scalar_lea.sflag [#allocation4], %s3339
        %s3341 = sand.u32 %s118, 1
        %s3342 = smul.addr %s3341, 8
        %s3343 = scalar_lea.vmem [#allocation5], %s3342
        // Predicated region
        $region41: #{tpu_custom_call.1} parent=35 // pred_check
          %p3344 = pneg %p128
        $region42: #{tpu_custom_call.1} parent=35 // pred_check_branch
          %3346 = sbr.rel (%p3344) target = $region44
        $region43: #{tpu_custom_call.1} parent=35 // pred_region
          %3348 = vsyncadd %s3340, 0
          %s3349 = smul.addr %s21, 8
          %s3350 = scalar_lea.hbm %s4, %s3349
          %s3352 = sshll.u32 %s3343, 4
          %s3353 = int_to_ptr.vmem [resolvable:$true] %s3352
          %s3354 = sshll.u32 %s3350, 4
          %s3355 = int_to_ptr.hbm [resolvable:$true] %s3354
          %3357 = dma.vmem_to_hbm [thread:$0]  %s3353, 128, %s3355, %s3340
        $region44: #{tpu_custom_call.1} parent=35 // pred_fallthru
          _
      $region36: #{tpu_custom_call.1} parent=5 // pred_fallthru
        _
      %p3358 = scmp.le.s32.totalorder 2, %s16
      // Predicated region
      $region45: #{tpu_custom_call.1} parent=5 // pred_check
        %p3359 = pneg %p3358
      $region46: #{tpu_custom_call.1} parent=5 // pred_check_branch
        %3361 = sbr.rel (%p3359) target = $region48
      $region47: #{tpu_custom_call.1} parent=5 // pred_region
        %s3362 = ssub.s32 %s16, 2
        // Predicated region
        $region49: #{tpu_custom_call.1} parent=47 // pred_check
          %p3363 = pneg %p134
        $region50: #{tpu_custom_call.1} parent=47 // pred_check_branch
          %3365 = sbr.rel (%p3363) target = $region52
        $region51: #{tpu_custom_call.1} parent=47 // pred_region
          %s3366 = sand.u32 %s119, 1
          %s3367 = scalar_lea.sflag [#allocation4], %s3366
          %s3368 = sand.u32 %s119, 1
          %s3369 = smul.addr %s3368, 8
          %s3370 = scalar_lea.vmem [#allocation5], %s3369
          %3372 = dma.done %s3367, 128
        $region52: #{tpu_custom_call.1} parent=47 // pred_fallthru
          _
      $region48: #{tpu_custom_call.1} parent=5 // pred_fallthru
        _
    $region6: #{tpu_custom_call.1} parent=1 // loop_footer
      %s20 = sadd.s32 1, %s16
    $region7: #{tpu_custom_call.1} parent=1 // loop_footer_branch
      %15 = sbr.rel target = $region3
    $region8: #{tpu_custom_call.1} parent=1 // loop_exit
      _
    %3373 = vsyncpa [#allocation3], 1
    %s3374 = scalar_lea.sflag [#allocation3], 1
    %3375 = vsyncpa %s3374, 1
    %3376 = vsyncpa [#allocation4], 1
    %s3377 = scalar_lea.sflag [#allocation4], 1
    %3378 = vsyncpa %s3377, 1

</llo_original>
